<compile_context>
chip_gen: v6e
topology: v6e:2x2x1
jax: 0.10.0
libtpu: 0.0.40
codegen_flags: <defaults>
</compile_context>

<pallas_src>
import functools

import jax
import jax.numpy as jnp
from jax.experimental import pallas as pl
from jax.experimental.pallas import tpu as pltpu


def _round_up(x: int, m: int) -> int:
    return ((x + m - 1) // m) * m


def _mlp_kernel(*refs, num_layers, act_fn):
    """refs = (x_ref, w0, b0, w1, b1, ..., w_{L-1}, b_{L-1}, out_ref)."""
    x_ref = refs[0]
    out_ref = refs[-1]
    wb = refs[1:-1]

    h = x_ref[...]
    for i in range(num_layers):
        w = wb[2 * i][...]
        b = wb[2 * i + 1][...]
        # Weights are pre-transposed to (in, out): single cast of h to the MXU
        # operand dtype, plain matmul, f32 accumulation.
        h = jnp.dot(h.astype(w.dtype), w, preferred_element_type=jnp.float32)
        h = h + b.astype(jnp.float32)               # bias-add in f32
        if act_fn is not None and i < num_layers - 1:
            h = act_fn(h)                           # hidden activation in f32
    out_ref[...] = h.astype(out_ref.dtype)


def prepare_mlp_params(weights, biases, compute_dtype=None):
    """One-time parameter prep (hoisted out of the per-call path).

    Transposes each (out, in) Linear weight to (in, out), zero-pads the hidden
    feature dims to multiples of 128 (input and output feature dims stay
    unpadded), and stores biases as (1, out) f32.  Padded hidden columns hold
    act(0) after the activation; they are annihilated by the zero-padded K
    rows of the following weight, so the result is exact for any activation.

    compute_dtype (e.g. jnp.bfloat16) selects the MXU operand dtype for the
    weights; accumulation stays f32 inside the kernel.
    """
    num_layers = len(weights)
    input_dim = int(weights[0].shape[1])
    output_dim = int(weights[-1].shape[0])

    dims = [input_dim] + [int(w.shape[0]) for w in weights]
    # input (K of layer 0) and output (N of last layer) unpadded; hidden -> 128.
    dims_pad = ([input_dim]
                + [_round_up(d, 128) for d in dims[1:-1]]
                + [output_dim])

    ws, bs = [], []
    for i, (w, b) in enumerate(zip(weights, biases)):
        out_f, in_f = w.shape
        in_p, out_p = dims_pad[i], dims_pad[i + 1]
        wdt = jnp.dtype(compute_dtype) if compute_dtype is not None else w.dtype
        wt = jnp.zeros((in_p, out_p), dtype=wdt).at[:in_f, :out_f].set(
            w.T.astype(wdt))
        bp = jnp.zeros((1, out_p), dtype=jnp.float32).at[0, :out_f].set(
            b.astype(jnp.float32))
        ws.append(wt)
        bs.append(bp)

    return dict(ws=ws, bs=bs, dims_pad=dims_pad, input_dim=input_dim,
                output_dim=output_dim, num_layers=num_layers)


def _vmem_budget_bytes() -> int:
    """Generation-aware VMEM budget (~85% of per-core capacity)."""
    try:
        cap = int(pltpu.get_tpu_info().vmem_capacity_bytes)
    except Exception:
        cap = 64 * 1024 * 1024      # conservative fallback, legal everywhere
    return max(int(cap * 0.85), 32 * 1024 * 1024)


def mlp_forward(x, params, activation=None, *, tm=None):
    """Fused MLP forward using prepared params (see prepare_mlp_params)."""
    ws, bs = params["ws"], params["bs"]
    input_dim = params["input_dim"]
    output_dim = params["output_dim"]
    num_layers = params["num_layers"]
    dims_pad = params["dims_pad"]

    lead = x.shape[0]
    x2 = x.reshape(-1, input_dim)
    n_rows = x2.shape[0]

    # Row tile: multiple of 8, <=512, and aim for >=4 grid steps when rows
    # allow (software pipelining everywhere, both TensorCores busy on v7x).
    if tm is None:
        tm = min(512, max(8, _round_up(-(-n_rows // 4), 8)))
    tm = max(8, _round_up(int(tm), 8))
    n_pad = _round_up(n_rows, tm)
    if n_pad != n_rows:
        x2 = jnp.pad(x2, ((0, n_pad - n_rows), (0, 0)))    # row pad only

    grid = (n_pad // tm,)

    operands = [x2]
    for w, b in zip(ws, bs):
        operands += [w, b]

    def build_in_specs(single_buffer_weights):
        specs = [pl.BlockSpec((tm, input_dim), lambda i: (i, 0))]
        for w, b in zip(ws, bs):
            for arr in (w, b):
                nd = arr.ndim
                if single_buffer_weights:
                    # Constant block index + single buffer: DMA'd once,
                    # VMEM-resident, no 2x weight footprint.
                    specs.append(pl.BlockSpec(arr.shape,
                                              lambda i, _nd=nd: (0,) * _nd,
                                              pipeline_mode=pl.Buffered(1)))
                else:
                    specs.append(pl.BlockSpec(arr.shape,
                                              lambda i, _nd=nd: (0,) * _nd))
        return specs

    # Output stays unpadded in the feature dim (full-extent last dim).
    out_spec = pl.BlockSpec((tm, output_dim), lambda i: (i, 0))
    out_shape = jax.ShapeDtypeStruct((n_pad, output_dim), x.dtype)

    # VMEM estimate: resident weights/biases (2x in case single-buffering falls
    # back to the default double buffering), double-buffered x/out tiles, and
    # f32 intermediate headroom; clamped to the per-generation budget.
    x_item = jnp.dtype(x.dtype).itemsize
    weight_bytes = sum(int(w.size) * w.dtype.itemsize +
                       int(b.size) * b.dtype.itemsize for w, b in zip(ws, bs))
    io_bytes = 2 * tm * input_dim * x_item + 2 * tm * output_dim * x_item
    interm_bytes = 6 * tm * max(dims_pad) * 4
    needed = 2 * weight_bytes + io_bytes + interm_bytes
    vmem_bytes = int(min(max(needed, 8 * 1024 * 1024), _vmem_budget_bytes()))
    # TODO(synk): add a K/N-tiled second grid axis ("arbitrary") fallback with a
    # VMEM f32 accumulator for MLPs whose resident weights exceed the VMEM
    # budget (mainly relevant on v7x's 64 MiB per TensorCore).

    kernel = functools.partial(_mlp_kernel, num_layers=num_layers,
                               act_fn=activation)

    def run(single_buffer_weights):
        return pl.pallas_call(
            kernel,
            grid=grid,
            in_specs=build_in_specs(single_buffer_weights),
            out_specs=out_spec,
            out_shape=out_shape,
            compiler_params=pltpu.CompilerParams(
                dimension_semantics=("parallel",),
                vmem_limit_bytes=vmem_bytes,
            ),
        )(*operands)

    try:
        out = run(True)
    except Exception:
        # Older jax without BlockSpec.pipeline_mode support: default buffering.
        out = run(False)

    if n_pad != n_rows:
        out = out[:n_rows]
    return out.reshape(lead, -1, output_dim)


def mlp_reference(x, weights, biases, activation=None):
    """Pure-JAX reference matching the PyTorch module exactly (f32 math)."""
    input_dim = weights[0].shape[1]
    output_dim = weights[-1].shape[0]
    h = x.reshape(-1, input_dim).astype(jnp.float32)
    for i, (w, b) in enumerate(zip(weights, biases)):
        h = h @ w.T.astype(jnp.float32) + b.astype(jnp.float32)
        if activation is not None and i < len(weights) - 1:
            h = activation(h)
    return h.astype(x.dtype).reshape(x.shape[0], -1, output_dim)


if __name__ == "__main__":
    key = jax.random.PRNGKey(0)

    # Shapes consistent with the module: x of shape (2, 4, 16, 16),
    # input_dim=16 -> 128 rows; MLP 16 -> 32 -> 32 -> 8 with ReLU hidden act.
    batch, chan, s1, s2 = 2, 4, 16, 16
    input_dim, n_hidden_layers, units, output_dim = 16, 2, 32, 8
    activation = jax.nn.relu

    keys = jax.random.split(key, 1 + 2 * (n_hidden_layers + 1))
    x = jax.random.normal(keys[0], (batch, chan, s1, s2), dtype=jnp.float32)

    weights, biases = [], []
    in_f = input_dim
    for i in range(n_hidden_layers):
        weights.append(0.1 * jax.random.normal(keys[1 + 2 * i], (units, in_f),
                                               jnp.float32))
        biases.append(0.1 * jax.random.normal(keys[2 + 2 * i], (units,),
                                              jnp.float32))
        in_f = units
    weights.append(0.1 * jax.random.normal(keys[1 + 2 * n_hidden_layers],
                                           (output_dim, units), jnp.float32))
    biases.append(0.1 * jax.random.normal(keys[2 + 2 * n_hidden_layers],
                                          (output_dim,), jnp.float32))

    ref = mlp_reference(x, weights, biases, activation=activation)

    # f32 path: exact vs reference.
    params_f32 = prepare_mlp_params(weights, biases)
    out = jax.block_until_ready(mlp_forward(x, params_f32, activation=activation))
    assert out.shape == (batch, (chan * s1 * s2) // input_dim, output_dim), out.shape
    assert bool(jnp.allclose(out, ref, atol=1e-5, rtol=1e-5)), "f32 mismatch vs reference"

    # bf16-weight MXU path (perf guidance for v5e/v6e/v7x): f32 accumulation,
    # looser tolerance due to bf16 operand rounding.
    params_bf16 = prepare_mlp_params(weights, biases, compute_dtype=jnp.bfloat16)
    out_bf16 = jax.block_until_ready(mlp_forward(x, params_bf16, activation=activation))
    assert out_bf16.shape == out.shape, out_bf16.shape
    assert bool(jnp.allclose(out_bf16, ref, atol=5e-2, rtol=5e-2)), "bf16 mismatch vs reference"

    print("KERNEL_OK")
</pallas_src>

<mosaic_0001>
module attributes {stable_mosaic.version = 11 : i64} {
  func.func @_mlp_kernel(%arg0: i32, %arg1: memref<32x16xf32, #tpu.memory_space<vmem>>, %arg2: memref<16x128xf32, #tpu.memory_space<vmem>>, %arg3: memref<1x128xf32, #tpu.memory_space<vmem>>, %arg4: memref<128x128xf32, #tpu.memory_space<vmem>>, %arg5: memref<1x128xf32, #tpu.memory_space<vmem>>, %arg6: memref<128x8xf32, #tpu.memory_space<vmem>>, %arg7: memref<1x8xf32, #tpu.memory_space<vmem>>, %arg8: memref<32x8xf32, #tpu.memory_space<vmem>>) attributes {dimension_semantics = [#tpu.dimension_semantics<parallel>], iteration_bounds = array<i64: 4>, scalar_prefetch = 0 : i64, scratch_operands = 0 : i64, tpu.core_type = #tpu.core_type<tc>, window_params = [{transform_indices = @transform_0, window_bounds = array<i64: 32, 16>}, {pipeline_mode = #tpu.pipeline_mode<synchronous>, transform_indices = @transform_1, window_bounds = array<i64: 16, 128>}, {pipeline_mode = #tpu.pipeline_mode<synchronous>, transform_indices = @transform_2, window_bounds = array<i64: 1, 128>}, {pipeline_mode = #tpu.pipeline_mode<synchronous>, transform_indices = @transform_3, window_bounds = array<i64: 128, 128>}, {pipeline_mode = #tpu.pipeline_mode<synchronous>, transform_indices = @transform_4, window_bounds = array<i64: 1, 128>}, {pipeline_mode = #tpu.pipeline_mode<synchronous>, transform_indices = @transform_5, window_bounds = array<i64: 128, 8>}, {pipeline_mode = #tpu.pipeline_mode<synchronous>, transform_indices = @transform_6, window_bounds = array<i64: 1, 8>}, {transform_indices = @transform_7, window_bounds = array<i64: 32, 8>}]} {
    %c0 = arith.constant 0 : index
    %c0_0 = arith.constant 0 : index
    %0 = vector.load %arg1[%c0, %c0_0] : memref<32x16xf32, #tpu.memory_space<vmem>>, vector<32x16xf32>
    %c0_1 = arith.constant 0 : index
    %c0_2 = arith.constant 0 : index
    %1 = vector.load %arg2[%c0_1, %c0_2] : memref<16x128xf32, #tpu.memory_space<vmem>>, vector<16x128xf32>
    %c0_3 = arith.constant 0 : index
    %c0_4 = arith.constant 0 : index
    %2 = vector.load %arg3[%c0_3, %c0_4] : memref<1x128xf32, #tpu.memory_space<vmem>>, vector<1x128xf32>
    %cst = arith.constant dense<0.000000e+00> : vector<32x128xf32>
    %3 = tpu.matmul %0, %1, %cst {dimension_numbers = #tpu.dot_dimension_numbers<[1], [0], [0], [1], [0, 0, 1, 1], [], []>} : vector<32x16xf32>, vector<16x128xf32>, vector<32x128xf32> -> vector<32x128xf32>
    %4 = vector.broadcast %2 : vector<1x128xf32> to vector<32x128xf32>
    %5 = arith.addf %3, %4 : vector<32x128xf32>
    %cst_5 = arith.constant 0.000000e+00 : f32
    %6 = vector.broadcast %cst_5 : f32 to vector<32x128xf32>
    %7 = arith.maximumf %5, %6 : vector<32x128xf32>
    %c0_6 = arith.constant 0 : index
    %c0_7 = arith.constant 0 : index
    %8 = vector.load %arg4[%c0_6, %c0_7] : memref<128x128xf32, #tpu.memory_space<vmem>>, vector<128x128xf32>
    %c0_8 = arith.constant 0 : index
    %c0_9 = arith.constant 0 : index
    %9 = vector.load %arg5[%c0_8, %c0_9] : memref<1x128xf32, #tpu.memory_space<vmem>>, vector<1x128xf32>
    %cst_10 = arith.constant dense<0.000000e+00> : vector<32x128xf32>
    %10 = tpu.matmul %7, %8, %cst_10 {dimension_numbers = #tpu.dot_dimension_numbers<[1], [0], [0], [1], [0, 0, 1, 1], [], []>} : vector<32x128xf32>, vector<128x128xf32>, vector<32x128xf32> -> vector<32x128xf32>
    %11 = vector.broadcast %9 : vector<1x128xf32> to vector<32x128xf32>
    %12 = arith.addf %10, %11 : vector<32x128xf32>
    %cst_11 = arith.constant 0.000000e+00 : f32
    %13 = vector.broadcast %cst_11 : f32 to vector<32x128xf32>
    %14 = arith.maximumf %12, %13 : vector<32x128xf32>
    %c0_12 = arith.constant 0 : index
    %c0_13 = arith.constant 0 : index
    %15 = vector.load %arg6[%c0_12, %c0_13] : memref<128x8xf32, #tpu.memory_space<vmem>>, vector<128x8xf32>
    %c0_14 = arith.constant 0 : index
    %c0_15 = arith.constant 0 : index
    %16 = vector.load %arg7[%c0_14, %c0_15] : memref<1x8xf32, #tpu.memory_space<vmem>>, vector<1x8xf32>
    %cst_16 = arith.constant dense<0.000000e+00> : vector<32x8xf32>
    %17 = tpu.matmul %14, %15, %cst_16 {dimension_numbers = #tpu.dot_dimension_numbers<[1], [0], [0], [1], [0, 0, 1, 1], [], []>} : vector<32x128xf32>, vector<128x8xf32>, vector<32x8xf32> -> vector<32x8xf32>
    %18 = vector.broadcast %16 : vector<1x8xf32> to vector<32x8xf32>
    %19 = arith.addf %17, %18 : vector<32x8xf32>
    %c0_17 = arith.constant 0 : index
    %c0_18 = arith.constant 0 : index
    %20 = vector.load %arg8[%c0_17, %c0_18] : memref<32x8xf32, #tpu.memory_space<vmem>>, vector<32x8xf32>
    tpu.vector_store %arg8[%c0_17, %c0_18], %19 {strides = array<i32>} : memref<32x8xf32, #tpu.memory_space<vmem>>, vector<32x8xf32>,
    return
  }
  func.func @transform_0(%arg0: i32) -> (i32, i32) {
    %c0_i32 = arith.constant 0 : i32
    %c0_i32_0 = arith.constant 0 : i32
    return %arg0, %c0_i32 : i32, i32
  }
  func.func @transform_1(%arg0: i32) -> (i32, i32) {
    %c0_i32 = arith.constant 0 : i32
    %c0_i32_0 = arith.constant 0 : i32
    %c0_i32_1 = arith.constant 0 : i32
    return %c0_i32, %c0_i32_0 : i32, i32
  }
  func.func @transform_2(%arg0: i32) -> (i32, i32) {
    %c0_i32 = arith.constant 0 : i32
    %c0_i32_0 = arith.constant 0 : i32
    %c0_i32_1 = arith.constant 0 : i32
    return %c0_i32, %c0_i32_0 : i32, i32
  }
  func.func @transform_3(%arg0: i32) -> (i32, i32) {
    %c0_i32 = arith.constant 0 : i32
    %c0_i32_0 = arith.constant 0 : i32
    %c0_i32_1 = arith.constant 0 : i32
    return %c0_i32, %c0_i32_0 : i32, i32
  }
  func.func @transform_4(%arg0: i32) -> (i32, i32) {
    %c0_i32 = arith.constant 0 : i32
    %c0_i32_0 = arith.constant 0 : i32
    %c0_i32_1 = arith.constant 0 : i32
    return %c0_i32, %c0_i32_0 : i32, i32
  }
  func.func @transform_5(%arg0: i32) -> (i32, i32) {
    %c0_i32 = arith.constant 0 : i32
    %c0_i32_0 = arith.constant 0 : i32
    %c0_i32_1 = arith.constant 0 : i32
    return %c0_i32, %c0_i32_0 : i32, i32
  }
  func.func @transform_6(%arg0: i32) -> (i32, i32) {
    %c0_i32 = arith.constant 0 : i32
    %c0_i32_0 = arith.constant 0 : i32
    %c0_i32_1 = arith.constant 0 : i32
    return %c0_i32, %c0_i32_0 : i32, i32
  }
  func.func @transform_7(%arg0: i32) -> (i32, i32) {
    %c0_i32 = arith.constant 0 : i32
    %c0_i32_0 = arith.constant 0 : i32
    return %arg0, %c0_i32 : i32, i32
  }
}

module attributes {stable_mosaic.version = 11 : i64} {
  func.func @_mlp_kernel(%arg0: i32, %arg1: memref<32x16xf32, #tpu.memory_space<vmem>>, %arg2: memref<16x128xf32, #tpu.memory_space<vmem>>, %arg3: memref<1x128xf32, #tpu.memory_space<vmem>>, %arg4: memref<128x128xf32, #tpu.memory_space<vmem>>, %arg5: memref<1x128xf32, #tpu.memory_space<vmem>>, %arg6: memref<128x8xf32, #tpu.memory_space<vmem>>, %arg7: memref<1x8xf32, #tpu.memory_space<vmem>>, %arg8: memref<32x8xf32, #tpu.memory_space<vmem>>) attributes {dimension_semantics = [#tpu.dimension_semantics<parallel>], iteration_bounds = array<i64: 4>, scalar_prefetch = 0 : i64, scratch_operands = 0 : i64, tpu.core_type = #tpu.core_type<tc>, window_params = [{transform_indices = @transform_0, window_bounds = array<i64: 32, 16>}, {pipeline_mode = #tpu.pipeline_mode<synchronous>, transform_indices = @transform_1, window_bounds = array<i64: 16, 128>}, {pipeline_mode = #tpu.pipeline_mode<synchronous>, transform_indices = @transform_2, window_bounds = array<i64: 1, 128>}, {pipeline_mode = #tpu.pipeline_mode<synchronous>, transform_indices = @transform_3, window_bounds = array<i64: 128, 128>}, {pipeline_mode = #tpu.pipeline_mode<synchronous>, transform_indices = @transform_4, window_bounds = array<i64: 1, 128>}, {pipeline_mode = #tpu.pipeline_mode<synchronous>, transform_indices = @transform_5, window_bounds = array<i64: 128, 8>}, {pipeline_mode = #tpu.pipeline_mode<synchronous>, transform_indices = @transform_6, window_bounds = array<i64: 1, 8>}, {transform_indices = @transform_7, window_bounds = array<i64: 32, 8>}]} {
    %c0 = arith.constant 0 : index
    %c0_0 = arith.constant 0 : index
    %0 = vector.load %arg1[%c0, %c0_0] : memref<32x16xf32, #tpu.memory_space<vmem>>, vector<32x16xf32>
    %c0_1 = arith.constant 0 : index
    %c0_2 = arith.constant 0 : index
    %1 = vector.load %arg2[%c0_1, %c0_2] : memref<16x128xf32, #tpu.memory_space<vmem>>, vector<16x128xf32>
    %c0_3 = arith.constant 0 : index
    %c0_4 = arith.constant 0 : index
    %2 = vector.load %arg3[%c0_3, %c0_4] : memref<1x128xf32, #tpu.memory_space<vmem>>, vector<1x128xf32>
    %cst = arith.constant dense<0.000000e+00> : vector<32x128xf32>
    %3 = tpu.matmul %0, %1, %cst {dimension_numbers = #tpu.dot_dimension_numbers<[1], [0], [0], [1], [0, 0, 1, 1], [], []>} : vector<32x16xf32>, vector<16x128xf32>, vector<32x128xf32> -> vector<32x128xf32>
    %4 = vector.broadcast %2 : vector<1x128xf32> to vector<32x128xf32>
    %5 = arith.addf %3, %4 : vector<32x128xf32>
    %cst_5 = arith.constant 0.000000e+00 : f32
    %6 = vector.broadcast %cst_5 : f32 to vector<32x128xf32>
    %7 = arith.maximumf %5, %6 : vector<32x128xf32>
    %c0_6 = arith.constant 0 : index
    %c0_7 = arith.constant 0 : index
    %8 = vector.load %arg4[%c0_6, %c0_7] : memref<128x128xf32, #tpu.memory_space<vmem>>, vector<128x128xf32>
    %c0_8 = arith.constant 0 : index
    %c0_9 = arith.constant 0 : index
    %9 = vector.load %arg5[%c0_8, %c0_9] : memref<1x128xf32, #tpu.memory_space<vmem>>, vector<1x128xf32>
    %cst_10 = arith.constant dense<0.000000e+00> : vector<32x128xf32>
    %10 = tpu.matmul %7, %8, %cst_10 {dimension_numbers = #tpu.dot_dimension_numbers<[1], [0], [0], [1], [0, 0, 1, 1], [], []>} : vector<32x128xf32>, vector<128x128xf32>, vector<32x128xf32> -> vector<32x128xf32>
    %11 = vector.broadcast %9 : vector<1x128xf32> to vector<32x128xf32>
    %12 = arith.addf %10, %11 : vector<32x128xf32>
    %cst_11 = arith.constant 0.000000e+00 : f32
    %13 = vector.broadcast %cst_11 : f32 to vector<32x128xf32>
    %14 = arith.maximumf %12, %13 : vector<32x128xf32>
    %c0_12 = arith.constant 0 : index
    %c0_13 = arith.constant 0 : index
    %15 = vector.load %arg6[%c0_12, %c0_13] : memref<128x8xf32, #tpu.memory_space<vmem>>, vector<128x8xf32>
    %c0_14 = arith.constant 0 : index
    %c0_15 = arith.constant 0 : index
    %16 = vector.load %arg7[%c0_14, %c0_15] : memref<1x8xf32, #tpu.memory_space<vmem>>, vector<1x8xf32>
    %cst_16 = arith.constant dense<0.000000e+00> : vector<32x8xf32>
    %17 = tpu.matmul %14, %15, %cst_16 {dimension_numbers = #tpu.dot_dimension_numbers<[1], [0], [0], [1], [0, 0, 1, 1], [], []>} : vector<32x128xf32>, vector<128x8xf32>, vector<32x8xf32> -> vector<32x8xf32>
    %18 = vector.broadcast %16 : vector<1x8xf32> to vector<32x8xf32>
    %19 = arith.addf %17, %18 : vector<32x8xf32>
    %c0_17 = arith.constant 0 : index
    %c0_18 = arith.constant 0 : index
    %20 = vector.load %arg8[%c0_17, %c0_18] : memref<32x8xf32, #tpu.memory_space<vmem>>, vector<32x8xf32>
    tpu.vector_store %arg8[%c0_17, %c0_18], %19 {strides = array<i32>} : memref<32x8xf32, #tpu.memory_space<vmem>>, vector<32x8xf32>,
    return
  }
  func.func @transform_0(%arg0: i32) -> (i32, i32) {
    %c0_i32 = arith.constant 0 : i32
    %c0_i32_0 = arith.constant 0 : i32
    return %arg0, %c0_i32 : i32, i32
  }
  func.func @transform_1(%arg0: i32) -> (i32, i32) {
    %c0_i32 = arith.constant 0 : i32
    %c0_i32_0 = arith.constant 0 : i32
    %c0_i32_1 = arith.constant 0 : i32
    return %c0_i32, %c0_i32_0 : i32, i32
  }
  func.func @transform_2(%arg0: i32) -> (i32, i32) {
    %c0_i32 = arith.constant 0 : i32
    %c0_i32_0 = arith.constant 0 : i32
    %c0_i32_1 = arith.constant 0 : i32
    return %c0_i32, %c0_i32_0 : i32, i32
  }
  func.func @transform_3(%arg0: i32) -> (i32, i32) {
    %c0_i32 = arith.constant 0 : i32
    %c0_i32_0 = arith.constant 0 : i32
    %c0_i32_1 = arith.constant 0 : i32
    return %c0_i32, %c0_i32_0 : i32, i32
  }
  func.func @transform_4(%arg0: i32) -> (i32, i32) {
    %c0_i32 = arith.constant 0 : i32
    %c0_i32_0 = arith.constant 0 : i32
    %c0_i32_1 = arith.constant 0 : i32
    return %c0_i32, %c0_i32_0 : i32, i32
  }
  func.func @transform_5(%arg0: i32) -> (i32, i32) {
    %c0_i32 = arith.constant 0 : i32
    %c0_i32_0 = arith.constant 0 : i32
    %c0_i32_1 = arith.constant 0 : i32
    return %c0_i32, %c0_i32_0 : i32, i32
  }
  func.func @transform_6(%arg0: i32) -> (i32, i32) {
    %c0_i32 = arith.constant 0 : i32
    %c0_i32_0 = arith.constant 0 : i32
    %c0_i32_1 = arith.constant 0 : i32
    return %c0_i32, %c0_i32_0 : i32, i32
  }
  func.func @transform_7(%arg0: i32) -> (i32, i32) {
    %c0_i32 = arith.constant 0 : i32
    %c0_i32_0 = arith.constant 0 : i32
    return %arg0, %c0_i32 : i32, i32
  }
}

</mosaic_0001>

<llo_original>
// kernel: tpu_custom_call.1
$region0: #{tpu_custom_call.1}
  #allocation0 [shape = 'u32[]', space=smem, size = 0x4, offset = 0x4, fixed_abs, tag = 'smem constant byte address 0x4 - core index']
  #allocation1 [shape = 'u32[144,128]{1,0:T(1,128)}', space=vmem, size = 0x12000, scoped, tag = 'internal scratch']
  %s0 = inlined_call_operand.vmem [shape: f32[128,16], index: 0, kind: input, shape index: {}]
  %s1 = inlined_call_operand.vmem [shape: f32[16,128], index: 1, kind: input, shape index: {}]
  %s2 = inlined_call_operand.vmem [shape: f32[1,128], index: 2, kind: input, shape index: {}]
  %s3 = inlined_call_operand.vmem [shape: f32[128,128], index: 3, kind: input, shape index: {}]
  %s4 = inlined_call_operand.vmem [shape: f32[1,128], index: 4, kind: input, shape index: {}]
  %s5 = inlined_call_operand.vmem [shape: f32[128,8], index: 5, kind: input, shape index: {}]
  %s6 = inlined_call_operand.vmem [shape: f32[1,8], index: 6, kind: input, shape index: {}]
  %s7 = inlined_call_operand.vmem [shape: f32[128,8], index: 7, kind: output, shape index: {}]
  %s8 = sld [smem:[#allocation0]]
  $region61: #{tpu_custom_call.1} parent=0
    _
  %s10 = ssub.s32 1, %s8
  %s11 = scalar_select 0, %s10, %s8
  loop: start=0, step=1, limit=6
  $region2: #{tpu_custom_call.1} parent=0 // loop_pre_header
    _
  $region3: #{tpu_custom_call.1} parent=0 // loop_header
    %s13 = sphi 0, %s17
    %p14 = scmp.ge.s32.totalorder %s13, 6
    %s23 = sphi 0, %s25
    %s26 = sphi 0, %s23
    %s27 = sphi 0, %s26
    %s43 = sphi 0, %s27
    %s47 = sphi 0, %s47
    %s49 = sphi 0, %s47
    %s50 = sphi 0, %s49
    %s64 = sphi 0, %s50
    %s68 = sphi 0, %s68
    %s70 = sphi 0, %s68
    %s71 = sphi 0, %s70
    %s85 = sphi 0, %s71
    %s89 = sphi 0, %s89
    %s91 = sphi 0, %s89
    %s92 = sphi 0, %s91
    %s106 = sphi 0, %s92
    %s110 = sphi 0, %s110
    %s112 = sphi 0, %s110
    %s113 = sphi 0, %s112
    %s127 = sphi 0, %s113
    %s131 = sphi 0, %s131
    %s133 = sphi 0, %s131
    %s134 = sphi 0, %s133
    %s148 = sphi 0, %s134
    %s152 = sphi 0, %s152
    %s154 = sphi 0, %s152
    %s155 = sphi 0, %s154
    %s169 = sphi 0, %s155
    %s175 = sphi 0, %s177
    %s178 = sphi 0, %s175
    %s179 = sphi 0, %s178
    %s195 = sphi 0, %s179
  $region4: #{tpu_custom_call.1} parent=0 // loop_header_branch
    %16 = sbr.rel (%p14) target = $region8
  $region5: #{tpu_custom_call.1} parent=0 // loop_body
    %s18 = ssub.s32 %s13, 1
    %s19 = ssub.s32 %s13, 2
    %s20 = sadd.s32 %s13, 1
    %s21 = ssub.s32 %s13, %s20
    %p22 = scmp.eq.s32.totalorder %s21, 0
    %s24 = sadd.s32 %s23, 1
    %s25 = scalar_select %p22, %s23, %s24
    %p28 = pneg %p22
    %p29 = scmp.eq.s32.totalorder %s13, 3
    %p30 = por %p28, %p29
    %p31 = scmp.ne.s32.totalorder %s23, %s26
    %p32 = scmp.eq.s32.totalorder %s13, 0
    %p33 = por %p31, %p32
    %p34 = scmp.ne.s32.totalorder %s23, %s26
    %p35 = scmp.eq.s32.totalorder %s18, 3
    %p36 = por %p34, %p35
    %p37 = scmp.ne.s32.totalorder %s26, %s27
    %p38 = scmp.eq.s32.totalorder %s18, 0
    %p39 = por %p37, %p38
    %p40 = scmp.ne.s32.totalorder %s26, %s27
    %p41 = scmp.eq.s32.totalorder %s19, 3
    %p42 = por %p40, %p41
    %p44 = scmp.ne.s32.totalorder %s27, %s43
    %p45 = scmp.eq.s32.totalorder %s19, 0
    %p46 = por %p44, %p45
    %s48 = sadd.s32 %s47, 1
    %p51 = scmp.eq.s32.totalorder %s13, 3
    %p52 = scmp.ne.s32.totalorder %s47, %s49
    %p53 = scmp.eq.s32.totalorder %s13, 0
    %p54 = por %p52, %p53
    %p55 = scmp.ne.s32.totalorder %s47, %s49
    %p56 = scmp.eq.s32.totalorder %s18, 3
    %p57 = por %p55, %p56
    %p58 = scmp.ne.s32.totalorder %s49, %s50
    %p59 = scmp.eq.s32.totalorder %s18, 0
    %p60 = por %p58, %p59
    %p61 = scmp.ne.s32.totalorder %s49, %s50
    %p62 = scmp.eq.s32.totalorder %s19, 3
    %p63 = por %p61, %p62
    %p65 = scmp.ne.s32.totalorder %s50, %s64
    %p66 = scmp.eq.s32.totalorder %s19, 0
    %p67 = por %p65, %p66
    %s69 = sadd.s32 %s68, 1
    %p72 = scmp.eq.s32.totalorder %s13, 3
    %p73 = scmp.ne.s32.totalorder %s68, %s70
    %p74 = scmp.eq.s32.totalorder %s13, 0
    %p75 = por %p73, %p74
    %p76 = scmp.ne.s32.totalorder %s68, %s70
    %p77 = scmp.eq.s32.totalorder %s18, 3
    %p78 = por %p76, %p77
    %p79 = scmp.ne.s32.totalorder %s70, %s71
    %p80 = scmp.eq.s32.totalorder %s18, 0
    %p81 = por %p79, %p80
    %p82 = scmp.ne.s32.totalorder %s70, %s71
    %p83 = scmp.eq.s32.totalorder %s19, 3
    %p84 = por %p82, %p83
    %p86 = scmp.ne.s32.totalorder %s71, %s85
    %p87 = scmp.eq.s32.totalorder %s19, 0
    %p88 = por %p86, %p87
    %s90 = sadd.s32 %s89, 1
    %p93 = scmp.eq.s32.totalorder %s13, 3
    %p94 = scmp.ne.s32.totalorder %s89, %s91
    %p95 = scmp.eq.s32.totalorder %s13, 0
    %p96 = por %p94, %p95
    %p97 = scmp.ne.s32.totalorder %s89, %s91
    %p98 = scmp.eq.s32.totalorder %s18, 3
    %p99 = por %p97, %p98
    %p100 = scmp.ne.s32.totalorder %s91, %s92
    %p101 = scmp.eq.s32.totalorder %s18, 0
    %p102 = por %p100, %p101
    %p103 = scmp.ne.s32.totalorder %s91, %s92
    %p104 = scmp.eq.s32.totalorder %s19, 3
    %p105 = por %p103, %p104
    %p107 = scmp.ne.s32.totalorder %s92, %s106
    %p108 = scmp.eq.s32.totalorder %s19, 0
    %p109 = por %p107, %p108
    %s111 = sadd.s32 %s110, 1
    %p114 = scmp.eq.s32.totalorder %s13, 3
    %p115 = scmp.ne.s32.totalorder %s110, %s112
    %p116 = scmp.eq.s32.totalorder %s13, 0
    %p117 = por %p115, %p116
    %p118 = scmp.ne.s32.totalorder %s110, %s112
    %p119 = scmp.eq.s32.totalorder %s18, 3
    %p120 = por %p118, %p119
    %p121 = scmp.ne.s32.totalorder %s112, %s113
    %p122 = scmp.eq.s32.totalorder %s18, 0
    %p123 = por %p121, %p122
    %p124 = scmp.ne.s32.totalorder %s112, %s113
    %p125 = scmp.eq.s32.totalorder %s19, 3
    %p126 = por %p124, %p125
    %p128 = scmp.ne.s32.totalorder %s113, %s127
    %p129 = scmp.eq.s32.totalorder %s19, 0
    %p130 = por %p128, %p129
    %s132 = sadd.s32 %s131, 1
    %p135 = scmp.eq.s32.totalorder %s13, 3
    %p136 = scmp.ne.s32.totalorder %s131, %s133
    %p137 = scmp.eq.s32.totalorder %s13, 0
    %p138 = por %p136, %p137
    %p139 = scmp.ne.s32.totalorder %s131, %s133
    %p140 = scmp.eq.s32.totalorder %s18, 3
    %p141 = por %p139, %p140
    %p142 = scmp.ne.s32.totalorder %s133, %s134
    %p143 = scmp.eq.s32.totalorder %s18, 0
    %p144 = por %p142, %p143
    %p145 = scmp.ne.s32.totalorder %s133, %s134
    %p146 = scmp.eq.s32.totalorder %s19, 3
    %p147 = por %p145, %p146
    %p149 = scmp.ne.s32.totalorder %s134, %s148
    %p150 = scmp.eq.s32.totalorder %s19, 0
    %p151 = por %p149, %p150
    %s153 = sadd.s32 %s152, 1
    %p156 = scmp.eq.s32.totalorder %s13, 3
    %p157 = scmp.ne.s32.totalorder %s152, %s154
    %p158 = scmp.eq.s32.totalorder %s13, 0
    %p159 = por %p157, %p158
    %p160 = scmp.ne.s32.totalorder %s152, %s154
    %p161 = scmp.eq.s32.totalorder %s18, 3
    %p162 = por %p160, %p161
    %p163 = scmp.ne.s32.totalorder %s154, %s155
    %p164 = scmp.eq.s32.totalorder %s18, 0
    %p165 = por %p163, %p164
    %p166 = scmp.ne.s32.totalorder %s154, %s155
    %p167 = scmp.eq.s32.totalorder %s19, 3
    %p168 = por %p166, %p167
    %p170 = scmp.ne.s32.totalorder %s155, %s169
    %p171 = scmp.eq.s32.totalorder %s19, 0
    %p172 = por %p170, %p171
    %s173 = ssub.s32 %s13, %s20
    %p174 = scmp.eq.s32.totalorder %s173, 0
    %s176 = sadd.s32 %s175, 1
    %s177 = scalar_select %p174, %s175, %s176
    %p180 = pneg %p174
    %p181 = scmp.eq.s32.totalorder %s13, 3
    %p182 = por %p180, %p181
    %p183 = scmp.ne.s32.totalorder %s175, %s178
    %p184 = scmp.eq.s32.totalorder %s13, 0
    %p185 = por %p183, %p184
    %p186 = scmp.ne.s32.totalorder %s175, %s178
    %p187 = scmp.eq.s32.totalorder %s18, 3
    %p188 = por %p186, %p187
    %p189 = scmp.ne.s32.totalorder %s178, %s179
    %p190 = scmp.eq.s32.totalorder %s18, 0
    %p191 = por %p189, %p190
    %p192 = scmp.ne.s32.totalorder %s178, %s179
    %p193 = scmp.eq.s32.totalorder %s19, 3
    %p194 = por %p192, %p193
    %p196 = scmp.ne.s32.totalorder %s179, %s195
    %p197 = scmp.eq.s32.totalorder %s19, 0
    %p198 = por %p196, %p197
    %p199 = scmp.le.s32.totalorder 1, %s13
    %p200 = scmp.lt.s32.totalorder %s13, 5
    %p201 = pnand %p199, %p200
    %p202 = pneg %p201
    // Predicated region
    $region9: #{tpu_custom_call.1} parent=5 // pred_check
      _
    $region10: #{tpu_custom_call.1} parent=5 // pred_check_branch
      %204 = sbr.rel (%p201) target = $region12
    $region11: #{tpu_custom_call.1} parent=5 // pred_region
      %s205 = ssub.s32 %s13, 1
      // Predicated region
      $region13: #{tpu_custom_call.1} parent=11 // pred_check
        %p206 = pneg %p60
      $region14: #{tpu_custom_call.1} parent=11 // pred_check_branch
        %208 = sbr.rel (%p206) target = $region16
      $region15: #{tpu_custom_call.1} parent=11 // pred_region
        _
      $region16: #{tpu_custom_call.1} parent=11 // pred_fallthru
        _
      // Predicated region
      $region17: #{tpu_custom_call.1} parent=11 // pred_check
        %p209 = pneg %p81
      $region18: #{tpu_custom_call.1} parent=11 // pred_check_branch
        %211 = sbr.rel (%p209) target = $region20
      $region19: #{tpu_custom_call.1} parent=11 // pred_region
        _
      $region20: #{tpu_custom_call.1} parent=11 // pred_fallthru
        _
      // Predicated region
      $region21: #{tpu_custom_call.1} parent=11 // pred_check
        %p212 = pneg %p102
      $region22: #{tpu_custom_call.1} parent=11 // pred_check_branch
        %214 = sbr.rel (%p212) target = $region24
      $region23: #{tpu_custom_call.1} parent=11 // pred_region
        _
      $region24: #{tpu_custom_call.1} parent=11 // pred_fallthru
        _
      // Predicated region
      $region25: #{tpu_custom_call.1} parent=11 // pred_check
        %p215 = pneg %p123
      $region26: #{tpu_custom_call.1} parent=11 // pred_check_branch
        %217 = sbr.rel (%p215) target = $region28
      $region27: #{tpu_custom_call.1} parent=11 // pred_region
        _
      $region28: #{tpu_custom_call.1} parent=11 // pred_fallthru
        _
      // Predicated region
      $region29: #{tpu_custom_call.1} parent=11 // pred_check
        %p218 = pneg %p144
      $region30: #{tpu_custom_call.1} parent=11 // pred_check_branch
        %220 = sbr.rel (%p218) target = $region32
      $region31: #{tpu_custom_call.1} parent=11 // pred_region
        _
      $region32: #{tpu_custom_call.1} parent=11 // pred_fallthru
        _
      // Predicated region
      $region33: #{tpu_custom_call.1} parent=11 // pred_check
        %p221 = pneg %p165
      $region34: #{tpu_custom_call.1} parent=11 // pred_check_branch
        %223 = sbr.rel (%p221) target = $region36
      $region35: #{tpu_custom_call.1} parent=11 // pred_region
        _
      $region36: #{tpu_custom_call.1} parent=11 // pred_fallthru
        _
    $region12: #{tpu_custom_call.1} parent=5 // pred_fallthru
      _
    %p224 = scmp.lt.s32.totalorder %s13, 4
    // Predicated region
    $region37: #{tpu_custom_call.1} parent=5 // pred_check
      %p225 = pneg %p224
    $region38: #{tpu_custom_call.1} parent=5 // pred_check_branch
      %227 = sbr.rel (%p225) target = $region40
    $region39: #{tpu_custom_call.1} parent=5 // pred_region
      // Predicated region
      $region41: #{tpu_custom_call.1} parent=39 // pred_check
        %p228 = pneg %p33
      $region42: #{tpu_custom_call.1} parent=39 // pred_check_branch
        %230 = sbr.rel (%p228) target = $region44
      $region43: #{tpu_custom_call.1} parent=39 // pred_region
        %s231 = smul.u32 4, %s13
        %p232 = scmp.lt.s32.totalorder %s231, 15
        %s233 = scalar_select %p232, %s231, 15
        %s234 = smul.addr %s233, 8
        %s235 = scalar_lea.vmem %s0, %s234
        %s236 = smul.u32 4, %s13
      $region44: #{tpu_custom_call.1} parent=39 // pred_fallthru
        _
    $region40: #{tpu_custom_call.1} parent=5 // pred_fallthru
      _
    %p237 = scmp.le.s32.totalorder 1, %s13
    %p238 = scmp.lt.s32.totalorder %s13, 5
    %p239 = pnand %p237, %p238
    %p240 = pneg %p239
    // Predicated region
    $region45: #{tpu_custom_call.1} parent=5 // pred_check
      _
    $region46: #{tpu_custom_call.1} parent=5 // pred_check_branch
      %242 = sbr.rel (%p239) target = $region48
    $region47: #{tpu_custom_call.1} parent=5 // pred_region
      %s243 = ssub.s32 %s13, 1
      %s244 = smul.u32 4, %s18
      %p245 = scmp.lt.s32.totalorder %s244, 15
      %s246 = scalar_select %p245, %s244, 15
      %s247 = smul.addr %s246, 8
      %s248 = scalar_lea.vmem %s0, %s247
      %p249 = pneg %p39
      %p250 = pneg %p36
      %p251 = pneg %p60
      %p252 = pneg %p57
      %p253 = pneg %p81
      %p254 = pneg %p78
      %p255 = pneg %p102
      %p256 = pneg %p99
      %p257 = pneg %p123
      %p258 = pneg %p120
      %p259 = pneg %p144
      %p260 = pneg %p141
      %p261 = pneg %p165
      %p262 = pneg %p162
      %p263 = pneg %p191
      %p264 = pneg %p188
      %s265 = smul.u32 4, %s18
      %p266 = scmp.lt.s32.totalorder %s265, 15
      %s267 = scalar_select %p266, %s265, 15
      %s268 = smul.addr %s267, 8
      %s269 = scalar_lea.vmem %s7, %s268
      %s270 = smul.u32 4, %s18
      %p271 = scmp.lt.s32.totalorder %s270, 15
      %s272 = scalar_select %p271, %s270, 15
      %s273 = smul.addr %s272, 8
      %s274 = scalar_lea.vmem %s0, %s273
      %s275 = smul.u32 4, %s18
      %s276 = smul.u32 4, %s18
      %p277 = scmp.lt.s32.totalorder %s276, 15
      %s278 = scalar_select %p277, %s276, 15
      %s279 = smul.addr %s278, 8
      %s280 = scalar_lea.vmem %s7, %s279
      %s281 = smul.u32 4, %s18
      %v282 = vld [vmem:[%s274] sm:$0xff]
      %v283 = vld [vmem:[%s274 + $0x8] sm:$0xff]
      %v284 = vld [vmem:[%s274 + $0x10] sm:$0xff]
      %v285 = vld [vmem:[%s274 + $0x18] sm:$0xff]
      %v286 = vld [vmem:[%s1] sm:$0xff]
      %v287 = vld [vmem:[%s1 + $0x8] sm:$0xff]
      %v288 = vld [vmem:[%s2] sm:$0x1]
      %v290 = vlaneseq
      %v291 = vshrl.u32 %v290, 7
      %v292 = vsub.s32 0, %v291
      %v293 = vrot.slane %v288, %v292
      %vm295 = vcmask 130048
      %v297 = vsel %vm295, %v282, 0
      %v300 = vsel %vm295, %v283, 0
      %v303 = vsel %vm295, %v284, 0
      %v306 = vsel %vm295, %v285, 0
      %308 = vmatprep.subr.mxu0 0.0
      %309 = vmatpush1.msra.mxu0 0.0
      %310 = vmatprep.subr.mxu0 0.0
      %311 = vmatpush1.msra.mxu0 0.0
      %312 = vmatprep.subr.mxu0 0.0
      %313 = vmatpush1.msra.mxu0 0.0
      %314 = vmatprep.subr.mxu0 0.0
      %315 = vmatpush1.msra.mxu0 0.0
      %316 = vmatprep.subr.mxu0 0.0
      %317 = vmatpush1.msra.mxu0 0.0
      %318 = vmatprep.subr.mxu0 0.0
      %319 = vmatpush1.msra.mxu0 0.0
      %320 = vmatprep.subr.mxu0 0.0
      %321 = vmatpush1.msra.mxu0 0.0
      %322 = vmatprep.subr.mxu0 0.0
      %323 = vmatpush1.msra.mxu0 0.0
      %324 = vmatprep.subr.mxu0 0.0
      %325 = vmatpush1.msra.mxu0 0.0
      %326 = vmatprep.subr.mxu0 0.0
      %327 = vmatpush1.msra.mxu0 0.0
      %328 = vmatprep.subr.mxu0 0.0
      %329 = vmatpush1.msra.mxu0 0.0
      %330 = vmatprep.subr.mxu0 0.0
      %331 = vmatpush1.msra.mxu0 0.0
      %332 = vmatprep.subr.mxu0 0.0
      %333 = vmatpush1.msra.mxu0 0.0
      %334 = vmatprep.subr.mxu0 0.0
      %335 = vmatpush1.msra.mxu0 0.0
      %336 = vmatprep.subr.mxu0 0.0
      %337 = vmatpush1.msra.mxu0 %v287
      %338 = vmatprep.subr.mxu0 0.0
      %339 = vmatpush1.msra.mxu0 %v286
      %340 = vmatprep.subr.mxu0 0.0
      %341 = vmatpush2.msra.mxu0 0.0
      %342 = vmatprep.subr.mxu0 0.0
      %343 = vmatpush2.msra.mxu0 0.0
      %344 = vmatprep.subr.mxu0 0.0
      %345 = vmatpush2.msra.mxu0 0.0
      %346 = vmatprep.subr.mxu0 0.0
      %347 = vmatpush2.msra.mxu0 0.0
      %348 = vmatprep.subr.mxu0 0.0
      %349 = vmatpush2.msra.mxu0 0.0
      %350 = vmatprep.subr.mxu0 0.0
      %351 = vmatpush2.msra.mxu0 0.0
      %352 = vmatprep.subr.mxu0 0.0
      %353 = vmatpush2.msra.mxu0 0.0
      %354 = vmatprep.subr.mxu0 0.0
      %355 = vmatpush2.msra.mxu0 0.0
      %356 = vmatprep.subr.mxu0 0.0
      %357 = vmatpush2.msra.mxu0 0.0
      %358 = vmatprep.subr.mxu0 0.0
      %359 = vmatpush2.msra.mxu0 0.0
      %360 = vmatprep.subr.mxu0 0.0
      %361 = vmatpush2.msra.mxu0 0.0
      %362 = vmatprep.subr.mxu0 0.0
      %363 = vmatpush2.msra.mxu0 0.0
      %364 = vmatprep.subr.mxu0 0.0
      %365 = vmatpush2.msra.mxu0 0.0
      %366 = vmatprep.subr.mxu0 0.0
      %367 = vmatpush2.msra.mxu0 0.0
      %368 = vmatprep.subr.mxu0 0.0
      %369 = vmatpush2.msra.mxu0 0.0
      %370 = vmatprep.subr.mxu0 0.0
      %371 = vmatpush2.msra.mxu0 0.0
      %372 = vmatprep.mubr.f32.mxu0 0.0
      %373 = vmatmul.mubr.f32.gmra.mxu0 %v297
      %v374 = vpop.f32.mrf.mxu0
      %v375 = vadd.f32 %v293, %v374
      %v376 = vpop.f32.mrf.mxu0
      %377 = vmatprep.mubr.f32.mxu0 0.0
      %378 = vmatmul.mubr.f32.gmra.mxu0 %v300
      %v379 = vpop.f32.mrf.mxu0
      %v380 = vadd.f32 %v293, %v379
      %v381 = vpop.f32.mrf.mxu0
      %382 = vmatprep.mubr.f32.mxu0 0.0
      %383 = vmatmul.mubr.f32.gmra.mxu0 %v303
      %v384 = vpop.f32.mrf.mxu0
      %v385 = vadd.f32 %v293, %v384
      %v386 = vpop.f32.mrf.mxu0
      %387 = vmatprep.mubr.f32.mxu0 0.0
      %388 = vmatmul.mubr.f32.gmra.mxu0 %v306
      %v389 = vpop.f32.mrf.mxu0
      %v390 = vadd.f32 %v293, %v389
      %v391 = vpop.f32.mrf.mxu0
      %392 = vdwg.mxu0
      %v393 = vmax.f32 %v375, 0.0
      %v394 = vmax.f32 %v380, 0.0
      %v395 = vmax.f32 %v385, 0.0
      %v396 = vmax.f32 %v390, 0.0
      %v397 = vld [vmem:[%s3] sm:$0xff]
      %v398 = vld [vmem:[%s3 + $0x8] sm:$0xff]
      %v399 = vld [vmem:[%s3 + $0x10] sm:$0xff]
      %v400 = vld [vmem:[%s3 + $0x18] sm:$0xff]
      %v401 = vld [vmem:[%s3 + $0x20] sm:$0xff]
      %v402 = vld [vmem:[%s3 + $0x28] sm:$0xff]
      %v403 = vld [vmem:[%s3 + $0x30] sm:$0xff]
      %v404 = vld [vmem:[%s3 + $0x38] sm:$0xff]
      %v405 = vld [vmem:[%s3 + $0x40] sm:$0xff]
      %v406 = vld [vmem:[%s3 + $0x48] sm:$0xff]
      %v407 = vld [vmem:[%s3 + $0x50] sm:$0xff]
      %v408 = vld [vmem:[%s3 + $0x58] sm:$0xff]
      %v409 = vld [vmem:[%s3 + $0x60] sm:$0xff]
      %v410 = vld [vmem:[%s3 + $0x68] sm:$0xff]
      %v411 = vld [vmem:[%s3 + $0x70] sm:$0xff]
      %v412 = vld [vmem:[%s3 + $0x78] sm:$0xff]
      %v413 = vld [vmem:[%s4] sm:$0x1]
      %v415 = vlaneseq
      %v416 = vshrl.u32 %v415, 7
      %v417 = vsub.s32 0, %v416
      %v418 = vrot.slane %v413, %v417
      %420 = vmatprep.subr.mxu0 0.0
      %421 = vmatpush1.msra.mxu0 %v412
      %422 = vmatprep.subr.mxu0 0.0
      %423 = vmatpush1.msra.mxu0 %v411
      %424 = vmatprep.subr.mxu0 0.0
      %425 = vmatpush1.msra.mxu0 %v410
      %426 = vmatprep.subr.mxu0 0.0
      %427 = vmatpush1.msra.mxu0 %v409
      %428 = vmatprep.subr.mxu0 0.0
      %429 = vmatpush1.msra.mxu0 %v408
      %430 = vmatprep.subr.mxu0 0.0
      %431 = vmatpush1.msra.mxu0 %v407
      %432 = vmatprep.subr.mxu0 0.0
      %433 = vmatpush1.msra.mxu0 %v406
      %434 = vmatprep.subr.mxu0 0.0
      %435 = vmatpush1.msra.mxu0 %v405
      %436 = vmatprep.subr.mxu0 0.0
      %437 = vmatpush1.msra.mxu0 %v404
      %438 = vmatprep.subr.mxu0 0.0
      %439 = vmatpush1.msra.mxu0 %v403
      %440 = vmatprep.subr.mxu0 0.0
      %441 = vmatpush1.msra.mxu0 %v402
      %442 = vmatprep.subr.mxu0 0.0
      %443 = vmatpush1.msra.mxu0 %v401
      %444 = vmatprep.subr.mxu0 0.0
      %445 = vmatpush1.msra.mxu0 %v400
      %446 = vmatprep.subr.mxu0 0.0
      %447 = vmatpush1.msra.mxu0 %v399
      %448 = vmatprep.subr.mxu0 0.0
      %449 = vmatpush1.msra.mxu0 %v398
      %450 = vmatprep.subr.mxu0 0.0
      %451 = vmatpush1.msra.mxu0 %v397
      %452 = vmatprep.subr.mxu0 0.0
      %453 = vmatpush2.msra.mxu0 0.0
      %454 = vmatprep.subr.mxu0 0.0
      %455 = vmatpush2.msra.mxu0 0.0
      %456 = vmatprep.subr.mxu0 0.0
      %457 = vmatpush2.msra.mxu0 0.0
      %458 = vmatprep.subr.mxu0 0.0
      %459 = vmatpush2.msra.mxu0 0.0
      %460 = vmatprep.subr.mxu0 0.0
      %461 = vmatpush2.msra.mxu0 0.0
      %462 = vmatprep.subr.mxu0 0.0
      %463 = vmatpush2.msra.mxu0 0.0
      %464 = vmatprep.subr.mxu0 0.0
      %465 = vmatpush2.msra.mxu0 0.0
      %466 = vmatprep.subr.mxu0 0.0
      %467 = vmatpush2.msra.mxu0 0.0
      %468 = vmatprep.subr.mxu0 0.0
      %469 = vmatpush2.msra.mxu0 0.0
      %470 = vmatprep.subr.mxu0 0.0
      %471 = vmatpush2.msra.mxu0 0.0
      %472 = vmatprep.subr.mxu0 0.0
      %473 = vmatpush2.msra.mxu0 0.0
      %474 = vmatprep.subr.mxu0 0.0
      %475 = vmatpush2.msra.mxu0 0.0
      %476 = vmatprep.subr.mxu0 0.0
      %477 = vmatpush2.msra.mxu0 0.0
      %478 = vmatprep.subr.mxu0 0.0
      %479 = vmatpush2.msra.mxu0 0.0
      %480 = vmatprep.subr.mxu0 0.0
      %481 = vmatpush2.msra.mxu0 0.0
      %482 = vmatprep.subr.mxu0 0.0
      %483 = vmatpush2.msra.mxu0 0.0
      %484 = vmatprep.mubr.f32.mxu0 0.0
      %485 = vmatmul.mubr.f32.gmra.mxu0 %v393
      %v486 = vpop.f32.mrf.mxu0
      %v487 = vadd.f32 %v418, %v486
      %v488 = vpop.f32.mrf.mxu0
      %489 = vmatprep.mubr.f32.mxu0 0.0
      %490 = vmatmul.mubr.f32.gmra.mxu0 %v394
      %v491 = vpop.f32.mrf.mxu0
      %v492 = vadd.f32 %v418, %v491
      %v493 = vpop.f32.mrf.mxu0
      %494 = vmatprep.mubr.f32.mxu0 0.0
      %495 = vmatmul.mubr.f32.gmra.mxu0 %v395
      %v496 = vpop.f32.mrf.mxu0
      %v497 = vadd.f32 %v418, %v496
      %v498 = vpop.f32.mrf.mxu0
      %499 = vmatprep.mubr.f32.mxu0 0.0
      %500 = vmatmul.mubr.f32.gmra.mxu0 %v396
      %v501 = vpop.f32.mrf.mxu0
      %v502 = vadd.f32 %v418, %v501
      %v503 = vpop.f32.mrf.mxu0
      %504 = vdwg.mxu0
      %v505 = vmax.f32 %v487, 0.0
      %v506 = vmax.f32 %v492, 0.0
      %v507 = vmax.f32 %v497, 0.0
      %v508 = vmax.f32 %v502, 0.0
      %v509 = vld [vmem:[%s5] sm:$0xff]
      %v510 = vld [vmem:[%s5 + $0x8] sm:$0xff]
      %v511 = vld [vmem:[%s5 + $0x10] sm:$0xff]
      %v512 = vld [vmem:[%s5 + $0x18] sm:$0xff]
      %v513 = vld [vmem:[%s5 + $0x20] sm:$0xff]
      %v514 = vld [vmem:[%s5 + $0x28] sm:$0xff]
      %v515 = vld [vmem:[%s5 + $0x30] sm:$0xff]
      %v516 = vld [vmem:[%s5 + $0x38] sm:$0xff]
      %v517 = vld [vmem:[%s5 + $0x40] sm:$0xff]
      %v518 = vld [vmem:[%s5 + $0x48] sm:$0xff]
      %v519 = vld [vmem:[%s5 + $0x50] sm:$0xff]
      %v520 = vld [vmem:[%s5 + $0x58] sm:$0xff]
      %v521 = vld [vmem:[%s5 + $0x60] sm:$0xff]
      %v522 = vld [vmem:[%s5 + $0x68] sm:$0xff]
      %v523 = vld [vmem:[%s5 + $0x70] sm:$0xff]
      %v524 = vld [vmem:[%s5 + $0x78] sm:$0xff]
      %v525 = vld [vmem:[%s6] sm:$0x1]
      %v527 = vlaneseq
      %v528 = vshrl.u32 %v527, 7
      %v529 = vsub.s32 0, %v528
      %v530 = vrot.slane %v525, %v529
      %532 = vmatprep.subr.mxu0 0.0
      %533 = vmatpush1.msra.mxu0 %v524
      %534 = vmatprep.subr.mxu0 0.0
      %535 = vmatpush1.msra.mxu0 %v523
      %536 = vmatprep.subr.mxu0 0.0
      %537 = vmatpush1.msra.mxu0 %v522
      %538 = vmatprep.subr.mxu0 0.0
      %539 = vmatpush1.msra.mxu0 %v521
      %540 = vmatprep.subr.mxu0 0.0
      %541 = vmatpush1.msra.mxu0 %v520
      %542 = vmatprep.subr.mxu0 0.0
      %543 = vmatpush1.msra.mxu0 %v519
      %544 = vmatprep.subr.mxu0 0.0
      %545 = vmatpush1.msra.mxu0 %v518
      %546 = vmatprep.subr.mxu0 0.0
      %547 = vmatpush1.msra.mxu0 %v517
      %548 = vmatprep.subr.mxu0 0.0
      %549 = vmatpush1.msra.mxu0 %v516
      %550 = vmatprep.subr.mxu0 0.0
      %551 = vmatpush1.msra.mxu0 %v515
      %552 = vmatprep.subr.mxu0 0.0
      %553 = vmatpush1.msra.mxu0 %v514
      %554 = vmatprep.subr.mxu0 0.0
      %555 = vmatpush1.msra.mxu0 %v513
      %556 = vmatprep.subr.mxu0 0.0
      %557 = vmatpush1.msra.mxu0 %v512
      %558 = vmatprep.subr.mxu0 0.0
      %559 = vmatpush1.msra.mxu0 %v511
      %560 = vmatprep.subr.mxu0 0.0
      %561 = vmatpush1.msra.mxu0 %v510
      %562 = vmatprep.subr.mxu0 0.0
      %563 = vmatpush1.msra.mxu0 %v509
      %564 = vmatprep.subr.mxu0 0.0
      %565 = vmatpush2.msra.mxu0 0.0
      %566 = vmatprep.subr.mxu0 0.0
      %567 = vmatpush2.msra.mxu0 0.0
      %568 = vmatprep.subr.mxu0 0.0
      %569 = vmatpush2.msra.mxu0 0.0
      %570 = vmatprep.subr.mxu0 0.0
      %571 = vmatpush2.msra.mxu0 0.0
      %572 = vmatprep.subr.mxu0 0.0
      %573 = vmatpush2.msra.mxu0 0.0
      %574 = vmatprep.subr.mxu0 0.0
      %575 = vmatpush2.msra.mxu0 0.0
      %576 = vmatprep.subr.mxu0 0.0
      %577 = vmatpush2.msra.mxu0 0.0
      %578 = vmatprep.subr.mxu0 0.0
      %579 = vmatpush2.msra.mxu0 0.0
      %580 = vmatprep.subr.mxu0 0.0
      %581 = vmatpush2.msra.mxu0 0.0
      %582 = vmatprep.subr.mxu0 0.0
      %583 = vmatpush2.msra.mxu0 0.0
      %584 = vmatprep.subr.mxu0 0.0
      %585 = vmatpush2.msra.mxu0 0.0
      %586 = vmatprep.subr.mxu0 0.0
      %587 = vmatpush2.msra.mxu0 0.0
      %588 = vmatprep.subr.mxu0 0.0
      %589 = vmatpush2.msra.mxu0 0.0
      %590 = vmatprep.subr.mxu0 0.0
      %591 = vmatpush2.msra.mxu0 0.0
      %592 = vmatprep.subr.mxu0 0.0
      %593 = vmatpush2.msra.mxu0 0.0
      %594 = vmatprep.subr.mxu0 0.0
      %595 = vmatpush2.msra.mxu0 0.0
      %596 = vmatprep.mubr.f32.mxu0 0.0
      %597 = vmatmul.mubr.f32.gmra.mxu0 %v505
      %v598 = vpop.f32.mrf.mxu0
      %v599 = vadd.f32 %v530, %v598
      %v600 = vpop.f32.mrf.mxu0
      %601 = vmatprep.mubr.f32.mxu0 0.0
      %602 = vmatmul.mubr.f32.gmra.mxu0 %v506
      %v603 = vpop.f32.mrf.mxu0
      %v604 = vadd.f32 %v530, %v603
      %v605 = vpop.f32.mrf.mxu0
      %606 = vmatprep.mubr.f32.mxu0 0.0
      %607 = vmatmul.mubr.f32.gmra.mxu0 %v507
      %v608 = vpop.f32.mrf.mxu0
      %v609 = vadd.f32 %v530, %v608
      %v610 = vpop.f32.mrf.mxu0
      %611 = vmatprep.mubr.f32.mxu0 0.0
      %612 = vmatmul.mubr.f32.gmra.mxu0 %v508
      %v613 = vpop.f32.mrf.mxu0
      %v614 = vadd.f32 %v530, %v613
      %v615 = vpop.f32.mrf.mxu0
      %616 = vdwg.mxu0
      %vm617 = vcmask 64512
      %618 = vst.msk [vmem:[%s280] sm:$0xff] %vm617, %v599
      %619 = vst.msk [vmem:[%s280 + $0x8] sm:$0xff] %vm617, %v604
      %620 = vst.msk [vmem:[%s280 + $0x10] sm:$0xff] %vm617, %v609
      %621 = vst.msk [vmem:[%s280 + $0x18] sm:$0xff] %vm617, %v614
      %s622 = smul.u32 4, %s18
      %p623 = scmp.lt.s32.totalorder %s622, 15
      %s624 = scalar_select %p623, %s622, 15
      %s625 = smul.addr %s624, 8
      %s626 = scalar_lea.vmem %s7, %s625
      // Predicated region
      $region49: #{tpu_custom_call.1} parent=47 // pred_check
        %p627 = pneg %p188
      $region50: #{tpu_custom_call.1} parent=47 // pred_check_branch
        %629 = sbr.rel (%p627) target = $region52
      $region51: #{tpu_custom_call.1} parent=47 // pred_region
        %s630 = smul.u32 4, %s18
      $region52: #{tpu_custom_call.1} parent=47 // pred_fallthru
        _
    $region48: #{tpu_custom_call.1} parent=5 // pred_fallthru
      _
    %p631 = scmp.le.s32.totalorder 2, %s13
    // Predicated region
    $region53: #{tpu_custom_call.1} parent=5 // pred_check
      %p632 = pneg %p631
    $region54: #{tpu_custom_call.1} parent=5 // pred_check_branch
      %634 = sbr.rel (%p632) target = $region56
    $region55: #{tpu_custom_call.1} parent=5 // pred_region
      %s635 = ssub.s32 %s13, 2
      // Predicated region
      $region57: #{tpu_custom_call.1} parent=55 // pred_check
        %p636 = pneg %p194
      $region58: #{tpu_custom_call.1} parent=55 // pred_check_branch
        %638 = sbr.rel (%p636) target = $region60
      $region59: #{tpu_custom_call.1} parent=55 // pred_region
        %s639 = smul.u32 4, %s19
        %p640 = scmp.lt.s32.totalorder %s639, 15
        %s641 = scalar_select %p640, %s639, 15
        %s642 = smul.addr %s641, 8
        %s643 = scalar_lea.vmem %s7, %s642
      $region60: #{tpu_custom_call.1} parent=55 // pred_fallthru
        _
    $region56: #{tpu_custom_call.1} parent=5 // pred_fallthru
      _
  $region6: #{tpu_custom_call.1} parent=0 // loop_footer
    %s17 = sadd.s32 1, %s13
  $region7: #{tpu_custom_call.1} parent=0 // loop_footer_branch
    %12 = sbr.rel target = $region3
  $region8: #{tpu_custom_call.1} parent=0 // loop_exit
    _

// kernel: tpu_custom_call.1
$region0: #{tpu_custom_call.1}
  #allocation0 [shape = 'u32[]', space=smem, size = 0x4, offset = 0x4, fixed_abs, tag = 'smem constant byte address 0x4 - core index']
  #allocation1 [shape = 'u32[144,128]{1,0:T(1,128)}', space=vmem, size = 0x12000, scoped, tag = 'internal scratch']
  %s0 = inlined_call_operand.vmem [shape: f32[128,16], index: 0, kind: input, shape index: {}]
  %s1 = inlined_call_operand.vmem [shape: f32[16,128], index: 1, kind: input, shape index: {}]
  %s2 = inlined_call_operand.vmem [shape: f32[1,128], index: 2, kind: input, shape index: {}]
  %s3 = inlined_call_operand.vmem [shape: f32[128,128], index: 3, kind: input, shape index: {}]
  %s4 = inlined_call_operand.vmem [shape: f32[1,128], index: 4, kind: input, shape index: {}]
  %s5 = inlined_call_operand.vmem [shape: f32[128,8], index: 5, kind: input, shape index: {}]
  %s6 = inlined_call_operand.vmem [shape: f32[1,8], index: 6, kind: input, shape index: {}]
  %s7 = inlined_call_operand.vmem [shape: f32[128,8], index: 7, kind: output, shape index: {}]
  %s8 = sld [smem:[#allocation0]]
  $region61: #{tpu_custom_call.1} parent=0
    _
  %s10 = ssub.s32 1, %s8
  %s11 = scalar_select 0, %s10, %s8
  loop: start=0, step=1, limit=6
  $region2: #{tpu_custom_call.1} parent=0 // loop_pre_header
    _
  $region3: #{tpu_custom_call.1} parent=0 // loop_header
    %s13 = sphi 0, %s17
    %p14 = scmp.ge.s32.totalorder %s13, 6
    %s23 = sphi 0, %s25
    %s26 = sphi 0, %s23
    %s27 = sphi 0, %s26
    %s43 = sphi 0, %s27
    %s47 = sphi 0, %s47
    %s49 = sphi 0, %s47
    %s50 = sphi 0, %s49
    %s64 = sphi 0, %s50
    %s68 = sphi 0, %s68
    %s70 = sphi 0, %s68
    %s71 = sphi 0, %s70
    %s85 = sphi 0, %s71
    %s89 = sphi 0, %s89
    %s91 = sphi 0, %s89
    %s92 = sphi 0, %s91
    %s106 = sphi 0, %s92
    %s110 = sphi 0, %s110
    %s112 = sphi 0, %s110
    %s113 = sphi 0, %s112
    %s127 = sphi 0, %s113
    %s131 = sphi 0, %s131
    %s133 = sphi 0, %s131
    %s134 = sphi 0, %s133
    %s148 = sphi 0, %s134
    %s152 = sphi 0, %s152
    %s154 = sphi 0, %s152
    %s155 = sphi 0, %s154
    %s169 = sphi 0, %s155
    %s175 = sphi 0, %s177
    %s178 = sphi 0, %s175
    %s179 = sphi 0, %s178
    %s195 = sphi 0, %s179
  $region4: #{tpu_custom_call.1} parent=0 // loop_header_branch
    %16 = sbr.rel (%p14) target = $region8
  $region5: #{tpu_custom_call.1} parent=0 // loop_body
    %s18 = ssub.s32 %s13, 1
    %s19 = ssub.s32 %s13, 2
    %s20 = sadd.s32 %s13, 1
    %s21 = ssub.s32 %s13, %s20
    %p22 = scmp.eq.s32.totalorder %s21, 0
    %s24 = sadd.s32 %s23, 1
    %s25 = scalar_select %p22, %s23, %s24
    %p28 = pneg %p22
    %p29 = scmp.eq.s32.totalorder %s13, 3
    %p30 = por %p28, %p29
    %p31 = scmp.ne.s32.totalorder %s23, %s26
    %p32 = scmp.eq.s32.totalorder %s13, 0
    %p33 = por %p31, %p32
    %p34 = scmp.ne.s32.totalorder %s23, %s26
    %p35 = scmp.eq.s32.totalorder %s18, 3
    %p36 = por %p34, %p35
    %p37 = scmp.ne.s32.totalorder %s26, %s27
    %p38 = scmp.eq.s32.totalorder %s18, 0
    %p39 = por %p37, %p38
    %p40 = scmp.ne.s32.totalorder %s26, %s27
    %p41 = scmp.eq.s32.totalorder %s19, 3
    %p42 = por %p40, %p41
    %p44 = scmp.ne.s32.totalorder %s27, %s43
    %p45 = scmp.eq.s32.totalorder %s19, 0
    %p46 = por %p44, %p45
    %s48 = sadd.s32 %s47, 1
    %p51 = scmp.eq.s32.totalorder %s13, 3
    %p52 = scmp.ne.s32.totalorder %s47, %s49
    %p53 = scmp.eq.s32.totalorder %s13, 0
    %p54 = por %p52, %p53
    %p55 = scmp.ne.s32.totalorder %s47, %s49
    %p56 = scmp.eq.s32.totalorder %s18, 3
    %p57 = por %p55, %p56
    %p58 = scmp.ne.s32.totalorder %s49, %s50
    %p59 = scmp.eq.s32.totalorder %s18, 0
    %p60 = por %p58, %p59
    %p61 = scmp.ne.s32.totalorder %s49, %s50
    %p62 = scmp.eq.s32.totalorder %s19, 3
    %p63 = por %p61, %p62
    %p65 = scmp.ne.s32.totalorder %s50, %s64
    %p66 = scmp.eq.s32.totalorder %s19, 0
    %p67 = por %p65, %p66
    %s69 = sadd.s32 %s68, 1
    %p72 = scmp.eq.s32.totalorder %s13, 3
    %p73 = scmp.ne.s32.totalorder %s68, %s70
    %p74 = scmp.eq.s32.totalorder %s13, 0
    %p75 = por %p73, %p74
    %p76 = scmp.ne.s32.totalorder %s68, %s70
    %p77 = scmp.eq.s32.totalorder %s18, 3
    %p78 = por %p76, %p77
    %p79 = scmp.ne.s32.totalorder %s70, %s71
    %p80 = scmp.eq.s32.totalorder %s18, 0
    %p81 = por %p79, %p80
    %p82 = scmp.ne.s32.totalorder %s70, %s71
    %p83 = scmp.eq.s32.totalorder %s19, 3
    %p84 = por %p82, %p83
    %p86 = scmp.ne.s32.totalorder %s71, %s85
    %p87 = scmp.eq.s32.totalorder %s19, 0
    %p88 = por %p86, %p87
    %s90 = sadd.s32 %s89, 1
    %p93 = scmp.eq.s32.totalorder %s13, 3
    %p94 = scmp.ne.s32.totalorder %s89, %s91
    %p95 = scmp.eq.s32.totalorder %s13, 0
    %p96 = por %p94, %p95
    %p97 = scmp.ne.s32.totalorder %s89, %s91
    %p98 = scmp.eq.s32.totalorder %s18, 3
    %p99 = por %p97, %p98
    %p100 = scmp.ne.s32.totalorder %s91, %s92
    %p101 = scmp.eq.s32.totalorder %s18, 0
    %p102 = por %p100, %p101
    %p103 = scmp.ne.s32.totalorder %s91, %s92
    %p104 = scmp.eq.s32.totalorder %s19, 3
    %p105 = por %p103, %p104
    %p107 = scmp.ne.s32.totalorder %s92, %s106
    %p108 = scmp.eq.s32.totalorder %s19, 0
    %p109 = por %p107, %p108
    %s111 = sadd.s32 %s110, 1
    %p114 = scmp.eq.s32.totalorder %s13, 3
    %p115 = scmp.ne.s32.totalorder %s110, %s112
    %p116 = scmp.eq.s32.totalorder %s13, 0
    %p117 = por %p115, %p116
    %p118 = scmp.ne.s32.totalorder %s110, %s112
    %p119 = scmp.eq.s32.totalorder %s18, 3
    %p120 = por %p118, %p119
    %p121 = scmp.ne.s32.totalorder %s112, %s113
    %p122 = scmp.eq.s32.totalorder %s18, 0
    %p123 = por %p121, %p122
    %p124 = scmp.ne.s32.totalorder %s112, %s113
    %p125 = scmp.eq.s32.totalorder %s19, 3
    %p126 = por %p124, %p125
    %p128 = scmp.ne.s32.totalorder %s113, %s127
    %p129 = scmp.eq.s32.totalorder %s19, 0
    %p130 = por %p128, %p129
    %s132 = sadd.s32 %s131, 1
    %p135 = scmp.eq.s32.totalorder %s13, 3
    %p136 = scmp.ne.s32.totalorder %s131, %s133
    %p137 = scmp.eq.s32.totalorder %s13, 0
    %p138 = por %p136, %p137
    %p139 = scmp.ne.s32.totalorder %s131, %s133
    %p140 = scmp.eq.s32.totalorder %s18, 3
    %p141 = por %p139, %p140
    %p142 = scmp.ne.s32.totalorder %s133, %s134
    %p143 = scmp.eq.s32.totalorder %s18, 0
    %p144 = por %p142, %p143
    %p145 = scmp.ne.s32.totalorder %s133, %s134
    %p146 = scmp.eq.s32.totalorder %s19, 3
    %p147 = por %p145, %p146
    %p149 = scmp.ne.s32.totalorder %s134, %s148
    %p150 = scmp.eq.s32.totalorder %s19, 0
    %p151 = por %p149, %p150
    %s153 = sadd.s32 %s152, 1
    %p156 = scmp.eq.s32.totalorder %s13, 3
    %p157 = scmp.ne.s32.totalorder %s152, %s154
    %p158 = scmp.eq.s32.totalorder %s13, 0
    %p159 = por %p157, %p158
    %p160 = scmp.ne.s32.totalorder %s152, %s154
    %p161 = scmp.eq.s32.totalorder %s18, 3
    %p162 = por %p160, %p161
    %p163 = scmp.ne.s32.totalorder %s154, %s155
    %p164 = scmp.eq.s32.totalorder %s18, 0
    %p165 = por %p163, %p164
    %p166 = scmp.ne.s32.totalorder %s154, %s155
    %p167 = scmp.eq.s32.totalorder %s19, 3
    %p168 = por %p166, %p167
    %p170 = scmp.ne.s32.totalorder %s155, %s169
    %p171 = scmp.eq.s32.totalorder %s19, 0
    %p172 = por %p170, %p171
    %s173 = ssub.s32 %s13, %s20
    %p174 = scmp.eq.s32.totalorder %s173, 0
    %s176 = sadd.s32 %s175, 1
    %s177 = scalar_select %p174, %s175, %s176
    %p180 = pneg %p174
    %p181 = scmp.eq.s32.totalorder %s13, 3
    %p182 = por %p180, %p181
    %p183 = scmp.ne.s32.totalorder %s175, %s178
    %p184 = scmp.eq.s32.totalorder %s13, 0
    %p185 = por %p183, %p184
    %p186 = scmp.ne.s32.totalorder %s175, %s178
    %p187 = scmp.eq.s32.totalorder %s18, 3
    %p188 = por %p186, %p187
    %p189 = scmp.ne.s32.totalorder %s178, %s179
    %p190 = scmp.eq.s32.totalorder %s18, 0
    %p191 = por %p189, %p190
    %p192 = scmp.ne.s32.totalorder %s178, %s179
    %p193 = scmp.eq.s32.totalorder %s19, 3
    %p194 = por %p192, %p193
    %p196 = scmp.ne.s32.totalorder %s179, %s195
    %p197 = scmp.eq.s32.totalorder %s19, 0
    %p198 = por %p196, %p197
    %p199 = scmp.le.s32.totalorder 1, %s13
    %p200 = scmp.lt.s32.totalorder %s13, 5
    %p201 = pnand %p199, %p200
    %p202 = pneg %p201
    // Predicated region
    $region9: #{tpu_custom_call.1} parent=5 // pred_check
      _
    $region10: #{tpu_custom_call.1} parent=5 // pred_check_branch
      %204 = sbr.rel (%p201) target = $region12
    $region11: #{tpu_custom_call.1} parent=5 // pred_region
      %s205 = ssub.s32 %s13, 1
      // Predicated region
      $region13: #{tpu_custom_call.1} parent=11 // pred_check
        %p206 = pneg %p60
      $region14: #{tpu_custom_call.1} parent=11 // pred_check_branch
        %208 = sbr.rel (%p206) target = $region16
      $region15: #{tpu_custom_call.1} parent=11 // pred_region
        _
      $region16: #{tpu_custom_call.1} parent=11 // pred_fallthru
        _
      // Predicated region
      $region17: #{tpu_custom_call.1} parent=11 // pred_check
        %p209 = pneg %p81
      $region18: #{tpu_custom_call.1} parent=11 // pred_check_branch
        %211 = sbr.rel (%p209) target = $region20
      $region19: #{tpu_custom_call.1} parent=11 // pred_region
        _
      $region20: #{tpu_custom_call.1} parent=11 // pred_fallthru
        _
      // Predicated region
      $region21: #{tpu_custom_call.1} parent=11 // pred_check
        %p212 = pneg %p102
      $region22: #{tpu_custom_call.1} parent=11 // pred_check_branch
        %214 = sbr.rel (%p212) target = $region24
      $region23: #{tpu_custom_call.1} parent=11 // pred_region
        _
      $region24: #{tpu_custom_call.1} parent=11 // pred_fallthru
        _
      // Predicated region
      $region25: #{tpu_custom_call.1} parent=11 // pred_check
        %p215 = pneg %p123
      $region26: #{tpu_custom_call.1} parent=11 // pred_check_branch
        %217 = sbr.rel (%p215) target = $region28
      $region27: #{tpu_custom_call.1} parent=11 // pred_region
        _
      $region28: #{tpu_custom_call.1} parent=11 // pred_fallthru
        _
      // Predicated region
      $region29: #{tpu_custom_call.1} parent=11 // pred_check
        %p218 = pneg %p144
      $region30: #{tpu_custom_call.1} parent=11 // pred_check_branch
        %220 = sbr.rel (%p218) target = $region32
      $region31: #{tpu_custom_call.1} parent=11 // pred_region
        _
      $region32: #{tpu_custom_call.1} parent=11 // pred_fallthru
        _
      // Predicated region
      $region33: #{tpu_custom_call.1} parent=11 // pred_check
        %p221 = pneg %p165
      $region34: #{tpu_custom_call.1} parent=11 // pred_check_branch
        %223 = sbr.rel (%p221) target = $region36
      $region35: #{tpu_custom_call.1} parent=11 // pred_region
        _
      $region36: #{tpu_custom_call.1} parent=11 // pred_fallthru
        _
    $region12: #{tpu_custom_call.1} parent=5 // pred_fallthru
      _
    %p224 = scmp.lt.s32.totalorder %s13, 4
    // Predicated region
    $region37: #{tpu_custom_call.1} parent=5 // pred_check
      %p225 = pneg %p224
    $region38: #{tpu_custom_call.1} parent=5 // pred_check_branch
      %227 = sbr.rel (%p225) target = $region40
    $region39: #{tpu_custom_call.1} parent=5 // pred_region
      // Predicated region
      $region41: #{tpu_custom_call.1} parent=39 // pred_check
        %p228 = pneg %p33
      $region42: #{tpu_custom_call.1} parent=39 // pred_check_branch
        %230 = sbr.rel (%p228) target = $region44
      $region43: #{tpu_custom_call.1} parent=39 // pred_region
        %s231 = smul.u32 4, %s13
        %p232 = scmp.lt.s32.totalorder %s231, 15
        %s233 = scalar_select %p232, %s231, 15
        %s234 = smul.addr %s233, 8
        %s235 = scalar_lea.vmem %s0, %s234
        %s236 = smul.u32 4, %s13
      $region44: #{tpu_custom_call.1} parent=39 // pred_fallthru
        _
    $region40: #{tpu_custom_call.1} parent=5 // pred_fallthru
      _
    %p237 = scmp.le.s32.totalorder 1, %s13
    %p238 = scmp.lt.s32.totalorder %s13, 5
    %p239 = pnand %p237, %p238
    %p240 = pneg %p239
    // Predicated region
    $region45: #{tpu_custom_call.1} parent=5 // pred_check
      _
    $region46: #{tpu_custom_call.1} parent=5 // pred_check_branch
      %242 = sbr.rel (%p239) target = $region48
    $region47: #{tpu_custom_call.1} parent=5 // pred_region
      %s243 = ssub.s32 %s13, 1
      %s244 = smul.u32 4, %s18
      %p245 = scmp.lt.s32.totalorder %s244, 15
      %s246 = scalar_select %p245, %s244, 15
      %s247 = smul.addr %s246, 8
      %s248 = scalar_lea.vmem %s0, %s247
      %p249 = pneg %p39
      %p250 = pneg %p36
      %p251 = pneg %p60
      %p252 = pneg %p57
      %p253 = pneg %p81
      %p254 = pneg %p78
      %p255 = pneg %p102
      %p256 = pneg %p99
      %p257 = pneg %p123
      %p258 = pneg %p120
      %p259 = pneg %p144
      %p260 = pneg %p141
      %p261 = pneg %p165
      %p262 = pneg %p162
      %p263 = pneg %p191
      %p264 = pneg %p188
      %s265 = smul.u32 4, %s18
      %p266 = scmp.lt.s32.totalorder %s265, 15
      %s267 = scalar_select %p266, %s265, 15
      %s268 = smul.addr %s267, 8
      %s269 = scalar_lea.vmem %s7, %s268
      %s270 = smul.u32 4, %s18
      %p271 = scmp.lt.s32.totalorder %s270, 15
      %s272 = scalar_select %p271, %s270, 15
      %s273 = smul.addr %s272, 8
      %s274 = scalar_lea.vmem %s0, %s273
      %s275 = smul.u32 4, %s18
      %s276 = smul.u32 4, %s18
      %p277 = scmp.lt.s32.totalorder %s276, 15
      %s278 = scalar_select %p277, %s276, 15
      %s279 = smul.addr %s278, 8
      %s280 = scalar_lea.vmem %s7, %s279
      %s281 = smul.u32 4, %s18
      %v282 = vld [vmem:[%s274] sm:$0xff]
      %v283 = vld [vmem:[%s274 + $0x8] sm:$0xff]
      %v284 = vld [vmem:[%s274 + $0x10] sm:$0xff]
      %v285 = vld [vmem:[%s274 + $0x18] sm:$0xff]
      %v286 = vld [vmem:[%s1] sm:$0xff]
      %v287 = vld [vmem:[%s1 + $0x8] sm:$0xff]
      %v288 = vld [vmem:[%s2] sm:$0x1]
      %v290 = vlaneseq
      %v291 = vshrl.u32 %v290, 7
      %v292 = vsub.s32 0, %v291
      %v293 = vrot.slane %v288, %v292
      %vm295 = vcmask 130048
      %v297 = vsel %vm295, %v282, 0
      %v300 = vsel %vm295, %v283, 0
      %v303 = vsel %vm295, %v284, 0
      %v306 = vsel %vm295, %v285, 0
      %308 = vmatprep.subr.mxu0 0.0
      %309 = vmatpush1.msra.mxu0 0.0
      %310 = vmatprep.subr.mxu0 0.0
      %311 = vmatpush1.msra.mxu0 0.0
      %312 = vmatprep.subr.mxu0 0.0
      %313 = vmatpush1.msra.mxu0 0.0
      %314 = vmatprep.subr.mxu0 0.0
      %315 = vmatpush1.msra.mxu0 0.0
      %316 = vmatprep.subr.mxu0 0.0
      %317 = vmatpush1.msra.mxu0 0.0
      %318 = vmatprep.subr.mxu0 0.0
      %319 = vmatpush1.msra.mxu0 0.0
      %320 = vmatprep.subr.mxu0 0.0
      %321 = vmatpush1.msra.mxu0 0.0
      %322 = vmatprep.subr.mxu0 0.0
      %323 = vmatpush1.msra.mxu0 0.0
      %324 = vmatprep.subr.mxu0 0.0
      %325 = vmatpush1.msra.mxu0 0.0
      %326 = vmatprep.subr.mxu0 0.0
      %327 = vmatpush1.msra.mxu0 0.0
      %328 = vmatprep.subr.mxu0 0.0
      %329 = vmatpush1.msra.mxu0 0.0
      %330 = vmatprep.subr.mxu0 0.0
      %331 = vmatpush1.msra.mxu0 0.0
      %332 = vmatprep.subr.mxu0 0.0
      %333 = vmatpush1.msra.mxu0 0.0
      %334 = vmatprep.subr.mxu0 0.0
      %335 = vmatpush1.msra.mxu0 0.0
      %336 = vmatprep.subr.mxu0 0.0
      %337 = vmatpush1.msra.mxu0 %v287
      %338 = vmatprep.subr.mxu0 0.0
      %339 = vmatpush1.msra.mxu0 %v286
      %340 = vmatprep.subr.mxu0 0.0
      %341 = vmatpush2.msra.mxu0 0.0
      %342 = vmatprep.subr.mxu0 0.0
      %343 = vmatpush2.msra.mxu0 0.0
      %344 = vmatprep.subr.mxu0 0.0
      %345 = vmatpush2.msra.mxu0 0.0
      %346 = vmatprep.subr.mxu0 0.0
      %347 = vmatpush2.msra.mxu0 0.0
      %348 = vmatprep.subr.mxu0 0.0
      %349 = vmatpush2.msra.mxu0 0.0
      %350 = vmatprep.subr.mxu0 0.0
      %351 = vmatpush2.msra.mxu0 0.0
      %352 = vmatprep.subr.mxu0 0.0
      %353 = vmatpush2.msra.mxu0 0.0
      %354 = vmatprep.subr.mxu0 0.0
      %355 = vmatpush2.msra.mxu0 0.0
      %356 = vmatprep.subr.mxu0 0.0
      %357 = vmatpush2.msra.mxu0 0.0
      %358 = vmatprep.subr.mxu0 0.0
      %359 = vmatpush2.msra.mxu0 0.0
      %360 = vmatprep.subr.mxu0 0.0
      %361 = vmatpush2.msra.mxu0 0.0
      %362 = vmatprep.subr.mxu0 0.0
      %363 = vmatpush2.msra.mxu0 0.0
      %364 = vmatprep.subr.mxu0 0.0
      %365 = vmatpush2.msra.mxu0 0.0
      %366 = vmatprep.subr.mxu0 0.0
      %367 = vmatpush2.msra.mxu0 0.0
      %368 = vmatprep.subr.mxu0 0.0
      %369 = vmatpush2.msra.mxu0 0.0
      %370 = vmatprep.subr.mxu0 0.0
      %371 = vmatpush2.msra.mxu0 0.0
      %372 = vmatprep.mubr.f32.mxu0 0.0
      %373 = vmatmul.mubr.f32.gmra.mxu0 %v297
      %v374 = vpop.f32.mrf.mxu0
      %v375 = vadd.f32 %v293, %v374
      %v376 = vpop.f32.mrf.mxu0
      %377 = vmatprep.mubr.f32.mxu0 0.0
      %378 = vmatmul.mubr.f32.gmra.mxu0 %v300
      %v379 = vpop.f32.mrf.mxu0
      %v380 = vadd.f32 %v293, %v379
      %v381 = vpop.f32.mrf.mxu0
      %382 = vmatprep.mubr.f32.mxu0 0.0
      %383 = vmatmul.mubr.f32.gmra.mxu0 %v303
      %v384 = vpop.f32.mrf.mxu0
      %v385 = vadd.f32 %v293, %v384
      %v386 = vpop.f32.mrf.mxu0
      %387 = vmatprep.mubr.f32.mxu0 0.0
      %388 = vmatmul.mubr.f32.gmra.mxu0 %v306
      %v389 = vpop.f32.mrf.mxu0
      %v390 = vadd.f32 %v293, %v389
      %v391 = vpop.f32.mrf.mxu0
      %392 = vdwg.mxu0
      %v393 = vmax.f32 %v375, 0.0
      %v394 = vmax.f32 %v380, 0.0
      %v395 = vmax.f32 %v385, 0.0
      %v396 = vmax.f32 %v390, 0.0
      %v397 = vld [vmem:[%s3] sm:$0xff]
      %v398 = vld [vmem:[%s3 + $0x8] sm:$0xff]
      %v399 = vld [vmem:[%s3 + $0x10] sm:$0xff]
      %v400 = vld [vmem:[%s3 + $0x18] sm:$0xff]
      %v401 = vld [vmem:[%s3 + $0x20] sm:$0xff]
      %v402 = vld [vmem:[%s3 + $0x28] sm:$0xff]
      %v403 = vld [vmem:[%s3 + $0x30] sm:$0xff]
      %v404 = vld [vmem:[%s3 + $0x38] sm:$0xff]
      %v405 = vld [vmem:[%s3 + $0x40] sm:$0xff]
      %v406 = vld [vmem:[%s3 + $0x48] sm:$0xff]
      %v407 = vld [vmem:[%s3 + $0x50] sm:$0xff]
      %v408 = vld [vmem:[%s3 + $0x58] sm:$0xff]
      %v409 = vld [vmem:[%s3 + $0x60] sm:$0xff]
      %v410 = vld [vmem:[%s3 + $0x68] sm:$0xff]
      %v411 = vld [vmem:[%s3 + $0x70] sm:$0xff]
      %v412 = vld [vmem:[%s3 + $0x78] sm:$0xff]
      %v413 = vld [vmem:[%s4] sm:$0x1]
      %v415 = vlaneseq
      %v416 = vshrl.u32 %v415, 7
      %v417 = vsub.s32 0, %v416
      %v418 = vrot.slane %v413, %v417
      %420 = vmatprep.subr.mxu0 0.0
      %421 = vmatpush1.msra.mxu0 %v412
      %422 = vmatprep.subr.mxu0 0.0
      %423 = vmatpush1.msra.mxu0 %v411
      %424 = vmatprep.subr.mxu0 0.0
      %425 = vmatpush1.msra.mxu0 %v410
      %426 = vmatprep.subr.mxu0 0.0
      %427 = vmatpush1.msra.mxu0 %v409
      %428 = vmatprep.subr.mxu0 0.0
      %429 = vmatpush1.msra.mxu0 %v408
      %430 = vmatprep.subr.mxu0 0.0
      %431 = vmatpush1.msra.mxu0 %v407
      %432 = vmatprep.subr.mxu0 0.0
      %433 = vmatpush1.msra.mxu0 %v406
      %434 = vmatprep.subr.mxu0 0.0
      %435 = vmatpush1.msra.mxu0 %v405
      %436 = vmatprep.subr.mxu0 0.0
      %437 = vmatpush1.msra.mxu0 %v404
      %438 = vmatprep.subr.mxu0 0.0
      %439 = vmatpush1.msra.mxu0 %v403
      %440 = vmatprep.subr.mxu0 0.0
      %441 = vmatpush1.msra.mxu0 %v402
      %442 = vmatprep.subr.mxu0 0.0
      %443 = vmatpush1.msra.mxu0 %v401
      %444 = vmatprep.subr.mxu0 0.0
      %445 = vmatpush1.msra.mxu0 %v400
      %446 = vmatprep.subr.mxu0 0.0
      %447 = vmatpush1.msra.mxu0 %v399
      %448 = vmatprep.subr.mxu0 0.0
      %449 = vmatpush1.msra.mxu0 %v398
      %450 = vmatprep.subr.mxu0 0.0
      %451 = vmatpush1.msra.mxu0 %v397
      %452 = vmatprep.subr.mxu0 0.0
      %453 = vmatpush2.msra.mxu0 0.0
      %454 = vmatprep.subr.mxu0 0.0
      %455 = vmatpush2.msra.mxu0 0.0
      %456 = vmatprep.subr.mxu0 0.0
      %457 = vmatpush2.msra.mxu0 0.0
      %458 = vmatprep.subr.mxu0 0.0
      %459 = vmatpush2.msra.mxu0 0.0
      %460 = vmatprep.subr.mxu0 0.0
      %461 = vmatpush2.msra.mxu0 0.0
      %462 = vmatprep.subr.mxu0 0.0
      %463 = vmatpush2.msra.mxu0 0.0
      %464 = vmatprep.subr.mxu0 0.0
      %465 = vmatpush2.msra.mxu0 0.0
      %466 = vmatprep.subr.mxu0 0.0
      %467 = vmatpush2.msra.mxu0 0.0
      %468 = vmatprep.subr.mxu0 0.0
      %469 = vmatpush2.msra.mxu0 0.0
      %470 = vmatprep.subr.mxu0 0.0
      %471 = vmatpush2.msra.mxu0 0.0
      %472 = vmatprep.subr.mxu0 0.0
      %473 = vmatpush2.msra.mxu0 0.0
      %474 = vmatprep.subr.mxu0 0.0
      %475 = vmatpush2.msra.mxu0 0.0
      %476 = vmatprep.subr.mxu0 0.0
      %477 = vmatpush2.msra.mxu0 0.0
      %478 = vmatprep.subr.mxu0 0.0
      %479 = vmatpush2.msra.mxu0 0.0
      %480 = vmatprep.subr.mxu0 0.0
      %481 = vmatpush2.msra.mxu0 0.0
      %482 = vmatprep.subr.mxu0 0.0
      %483 = vmatpush2.msra.mxu0 0.0
      %484 = vmatprep.mubr.f32.mxu0 0.0
      %485 = vmatmul.mubr.f32.gmra.mxu0 %v393
      %v486 = vpop.f32.mrf.mxu0
      %v487 = vadd.f32 %v418, %v486
      %v488 = vpop.f32.mrf.mxu0
      %489 = vmatprep.mubr.f32.mxu0 0.0
      %490 = vmatmul.mubr.f32.gmra.mxu0 %v394
      %v491 = vpop.f32.mrf.mxu0
      %v492 = vadd.f32 %v418, %v491
      %v493 = vpop.f32.mrf.mxu0
      %494 = vmatprep.mubr.f32.mxu0 0.0
      %495 = vmatmul.mubr.f32.gmra.mxu0 %v395
      %v496 = vpop.f32.mrf.mxu0
      %v497 = vadd.f32 %v418, %v496
      %v498 = vpop.f32.mrf.mxu0
      %499 = vmatprep.mubr.f32.mxu0 0.0
      %500 = vmatmul.mubr.f32.gmra.mxu0 %v396
      %v501 = vpop.f32.mrf.mxu0
      %v502 = vadd.f32 %v418, %v501
      %v503 = vpop.f32.mrf.mxu0
      %504 = vdwg.mxu0
      %v505 = vmax.f32 %v487, 0.0
      %v506 = vmax.f32 %v492, 0.0
      %v507 = vmax.f32 %v497, 0.0
      %v508 = vmax.f32 %v502, 0.0
      %v509 = vld [vmem:[%s5] sm:$0xff]
      %v510 = vld [vmem:[%s5 + $0x8] sm:$0xff]
      %v511 = vld [vmem:[%s5 + $0x10] sm:$0xff]
      %v512 = vld [vmem:[%s5 + $0x18] sm:$0xff]
      %v513 = vld [vmem:[%s5 + $0x20] sm:$0xff]
      %v514 = vld [vmem:[%s5 + $0x28] sm:$0xff]
      %v515 = vld [vmem:[%s5 + $0x30] sm:$0xff]
      %v516 = vld [vmem:[%s5 + $0x38] sm:$0xff]
      %v517 = vld [vmem:[%s5 + $0x40] sm:$0xff]
      %v518 = vld [vmem:[%s5 + $0x48] sm:$0xff]
      %v519 = vld [vmem:[%s5 + $0x50] sm:$0xff]
      %v520 = vld [vmem:[%s5 + $0x58] sm:$0xff]
      %v521 = vld [vmem:[%s5 + $0x60] sm:$0xff]
      %v522 = vld [vmem:[%s5 + $0x68] sm:$0xff]
      %v523 = vld [vmem:[%s5 + $0x70] sm:$0xff]
      %v524 = vld [vmem:[%s5 + $0x78] sm:$0xff]
      %v525 = vld [vmem:[%s6] sm:$0x1]
      %v527 = vlaneseq
      %v528 = vshrl.u32 %v527, 7
      %v529 = vsub.s32 0, %v528
      %v530 = vrot.slane %v525, %v529
      %532 = vmatprep.subr.mxu0 0.0
      %533 = vmatpush1.msra.mxu0 %v524
      %534 = vmatprep.subr.mxu0 0.0
      %535 = vmatpush1.msra.mxu0 %v523
      %536 = vmatprep.subr.mxu0 0.0
      %537 = vmatpush1.msra.mxu0 %v522
      %538 = vmatprep.subr.mxu0 0.0
      %539 = vmatpush1.msra.mxu0 %v521
      %540 = vmatprep.subr.mxu0 0.0
      %541 = vmatpush1.msra.mxu0 %v520
      %542 = vmatprep.subr.mxu0 0.0
      %543 = vmatpush1.msra.mxu0 %v519
      %544 = vmatprep.subr.mxu0 0.0
      %545 = vmatpush1.msra.mxu0 %v518
      %546 = vmatprep.subr.mxu0 0.0
      %547 = vmatpush1.msra.mxu0 %v517
      %548 = vmatprep.subr.mxu0 0.0
      %549 = vmatpush1.msra.mxu0 %v516
      %550 = vmatprep.subr.mxu0 0.0
      %551 = vmatpush1.msra.mxu0 %v515
      %552 = vmatprep.subr.mxu0 0.0
      %553 = vmatpush1.msra.mxu0 %v514
      %554 = vmatprep.subr.mxu0 0.0
      %555 = vmatpush1.msra.mxu0 %v513
      %556 = vmatprep.subr.mxu0 0.0
      %557 = vmatpush1.msra.mxu0 %v512
      %558 = vmatprep.subr.mxu0 0.0
      %559 = vmatpush1.msra.mxu0 %v511
      %560 = vmatprep.subr.mxu0 0.0
      %561 = vmatpush1.msra.mxu0 %v510
      %562 = vmatprep.subr.mxu0 0.0
      %563 = vmatpush1.msra.mxu0 %v509
      %564 = vmatprep.subr.mxu0 0.0
      %565 = vmatpush2.msra.mxu0 0.0
      %566 = vmatprep.subr.mxu0 0.0
      %567 = vmatpush2.msra.mxu0 0.0
      %568 = vmatprep.subr.mxu0 0.0
      %569 = vmatpush2.msra.mxu0 0.0
      %570 = vmatprep.subr.mxu0 0.0
      %571 = vmatpush2.msra.mxu0 0.0
      %572 = vmatprep.subr.mxu0 0.0
      %573 = vmatpush2.msra.mxu0 0.0
      %574 = vmatprep.subr.mxu0 0.0
      %575 = vmatpush2.msra.mxu0 0.0
      %576 = vmatprep.subr.mxu0 0.0
      %577 = vmatpush2.msra.mxu0 0.0
      %578 = vmatprep.subr.mxu0 0.0
      %579 = vmatpush2.msra.mxu0 0.0
      %580 = vmatprep.subr.mxu0 0.0
      %581 = vmatpush2.msra.mxu0 0.0
      %582 = vmatprep.subr.mxu0 0.0
      %583 = vmatpush2.msra.mxu0 0.0
      %584 = vmatprep.subr.mxu0 0.0
      %585 = vmatpush2.msra.mxu0 0.0
      %586 = vmatprep.subr.mxu0 0.0
      %587 = vmatpush2.msra.mxu0 0.0
      %588 = vmatprep.subr.mxu0 0.0
      %589 = vmatpush2.msra.mxu0 0.0
      %590 = vmatprep.subr.mxu0 0.0
      %591 = vmatpush2.msra.mxu0 0.0
      %592 = vmatprep.subr.mxu0 0.0
      %593 = vmatpush2.msra.mxu0 0.0
      %594 = vmatprep.subr.mxu0 0.0
      %595 = vmatpush2.msra.mxu0 0.0
      %596 = vmatprep.mubr.f32.mxu0 0.0
      %597 = vmatmul.mubr.f32.gmra.mxu0 %v505
      %v598 = vpop.f32.mrf.mxu0
      %v599 = vadd.f32 %v530, %v598
      %v600 = vpop.f32.mrf.mxu0
      %601 = vmatprep.mubr.f32.mxu0 0.0
      %602 = vmatmul.mubr.f32.gmra.mxu0 %v506
      %v603 = vpop.f32.mrf.mxu0
      %v604 = vadd.f32 %v530, %v603
      %v605 = vpop.f32.mrf.mxu0
      %606 = vmatprep.mubr.f32.mxu0 0.0
      %607 = vmatmul.mubr.f32.gmra.mxu0 %v507
      %v608 = vpop.f32.mrf.mxu0
      %v609 = vadd.f32 %v530, %v608
      %v610 = vpop.f32.mrf.mxu0
      %611 = vmatprep.mubr.f32.mxu0 0.0
      %612 = vmatmul.mubr.f32.gmra.mxu0 %v508
      %v613 = vpop.f32.mrf.mxu0
      %v614 = vadd.f32 %v530, %v613
      %v615 = vpop.f32.mrf.mxu0
      %616 = vdwg.mxu0
      %vm617 = vcmask 64512
      %618 = vst.msk [vmem:[%s280] sm:$0xff] %vm617, %v599
      %619 = vst.msk [vmem:[%s280 + $0x8] sm:$0xff] %vm617, %v604
      %620 = vst.msk [vmem:[%s280 + $0x10] sm:$0xff] %vm617, %v609
      %621 = vst.msk [vmem:[%s280 + $0x18] sm:$0xff] %vm617, %v614
      %s622 = smul.u32 4, %s18
      %p623 = scmp.lt.s32.totalorder %s622, 15
      %s624 = scalar_select %p623, %s622, 15
      %s625 = smul.addr %s624, 8
      %s626 = scalar_lea.vmem %s7, %s625
      // Predicated region
      $region49: #{tpu_custom_call.1} parent=47 // pred_check
        %p627 = pneg %p188
      $region50: #{tpu_custom_call.1} parent=47 // pred_check_branch
        %629 = sbr.rel (%p627) target = $region52
      $region51: #{tpu_custom_call.1} parent=47 // pred_region
        %s630 = smul.u32 4, %s18
      $region52: #{tpu_custom_call.1} parent=47 // pred_fallthru
        _
    $region48: #{tpu_custom_call.1} parent=5 // pred_fallthru
      _
    %p631 = scmp.le.s32.totalorder 2, %s13
    // Predicated region
    $region53: #{tpu_custom_call.1} parent=5 // pred_check
      %p632 = pneg %p631
    $region54: #{tpu_custom_call.1} parent=5 // pred_check_branch
      %634 = sbr.rel (%p632) target = $region56
    $region55: #{tpu_custom_call.1} parent=5 // pred_region
      %s635 = ssub.s32 %s13, 2
      // Predicated region
      $region57: #{tpu_custom_call.1} parent=55 // pred_check
        %p636 = pneg %p194
      $region58: #{tpu_custom_call.1} parent=55 // pred_check_branch
        %638 = sbr.rel (%p636) target = $region60
      $region59: #{tpu_custom_call.1} parent=55 // pred_region
        %s639 = smul.u32 4, %s19
        %p640 = scmp.lt.s32.totalorder %s639, 15
        %s641 = scalar_select %p640, %s639, 15
        %s642 = smul.addr %s641, 8
        %s643 = scalar_lea.vmem %s7, %s642
      $region60: #{tpu_custom_call.1} parent=55 // pred_fallthru
        _
    $region56: #{tpu_custom_call.1} parent=5 // pred_fallthru
      _
  $region6: #{tpu_custom_call.1} parent=0 // loop_footer
    %s17 = sadd.s32 1, %s13
  $region7: #{tpu_custom_call.1} parent=0 // loop_footer_branch
    %12 = sbr.rel target = $region3
  $region8: #{tpu_custom_call.1} parent=0 // loop_exit
    _

</llo_original>
